<compile_context>
chip_gen: v6e
topology: v6e:2x2x1
jax: 0.10.0
libtpu: 0.0.40
codegen_flags: <defaults>
</compile_context>

<pallas_src>
import jax
import jax.numpy as jnp
import numpy as np
from jax import lax
from jax.experimental import pallas as pl
from jax.experimental.pallas import tpu as pltpu

CHARSET = [chr(i) for i in range(32, 127)]   # stand-in for charset_ascii
NOUTPUT = len(CHARSET)                       # 95
NOUT_PAD = 128                               # lane/sublane + MXU friendly logits rows
HIDDEN = 32
HC = 16                                      # H rows per chunk (aligned to bf16 tiling)


def _make_text_kernel(TB, H, H_pad, W_pad):
    n_chunks = H_pad // HC

    def kernel(x_ref, w1_ref, b1_ref, rs_ref, w2_ref, b2_ref, o_ref, feat_ref):
        # feat_ref: (HIDDEN, TB*W_pad) f32 VMEM scratch, accumulated through the ref.
        feat_ref[...] = jnp.zeros_like(feat_ref)

        w1big = w1_ref[...]            # (HIDDEN*HC, 3*HC) block-diagonal conv weight
        b1rep = b1_ref[...]            # (HIDDEN*HC, 1)    bias, replicated per chunk row
        rsrep = rs_ref[...]            # (HIDDEN*HC, 1)    per-row sum_c W1[d, c]

        for t in range(TB):            # TB is a small static int
            img = x_ref.at[t]          # (3, H_pad, W_pad) sub-ref view (bf16)

            # ---- pass 1: per-image min / max (chunked; no large temporaries) ----
            def mm_body(k, carry):
                mn, mx = carry
                h0 = pl.multiple_of(k * HC, HC)
                sl = img[:, pl.ds(h0, HC), :].astype(jnp.float32)
                sl = sl.reshape(3 * HC, W_pad)
                mn = jnp.minimum(mn, sl.min(axis=1, keepdims=True).min(axis=0, keepdims=True))
                mx = jnp.maximum(mx, sl.max(axis=1, keepdims=True).max(axis=0, keepdims=True))
                return mn, mx

            mn, mx = lax.fori_loop(
                0, n_chunks, mm_body,
                (jnp.full((1, 1), jnp.inf, jnp.float32),
                 jnp.full((1, 1), -jnp.inf, jnp.float32)))

            # normalization (x - mn) / (mx - mn + 1e-6) folded into the conv.
            inv = pl.reciprocal(mx - mn + 1e-6, approx=True)     # (1,1), EUP slot
            w1s = w1big * inv                                    # tiny (HIDDEN*HC, 3*HC)
            bias = b1rep - (inv * mn) * rsrep                    # (HIDDEN*HC, 1)

            col0 = t * W_pad

            # ---- pass 2: 1x1 conv + ReLU, summed over H into the VMEM scratch ----
            def conv_body(k, carry):
                h0 = pl.multiple_of(k * HC, HC)
                xf = img[:, pl.ds(h0, HC), :].astype(jnp.float32)
                xf = xf.reshape(3 * HC, W_pad)                   # row index = c*HC + h
                hid = jnp.dot(w1s, xf, preferred_element_type=jnp.float32)
                hid = jnp.maximum(hid + bias, 0.0)               # (HIDDEN*HC, W_pad)
                if H_pad != H:                                   # ragged tail: mask padded rows
                    hloc = lax.broadcasted_iota(jnp.int32, (HIDDEN * HC, 1), 0) % HC
                    hid = jnp.where(h0 + hloc < H, hid, 0.0)
                part = hid.reshape(HIDDEN, HC, W_pad).sum(axis=1)   # (HIDDEN, W_pad)
                feat_ref[:, col0:col0 + W_pad] += part
                return carry

            lax.fori_loop(0, n_chunks, conv_body, 0, unroll=min(2, n_chunks))

        # ---- projection HIDDEN -> NOUT_PAD once, over all TB images' columns ----
        logits = jnp.dot(w2_ref[...], feat_ref[...],
                         preferred_element_type=jnp.float32) + b2_ref[...]
        for t in range(TB):
            o_ref[t] = logits[:, t * W_pad:(t + 1) * W_pad].astype(o_ref.dtype)

    return kernel


def _vmem_budget_bytes():
    # Generation-aware per-step budget (v7x has only 64 MiB physical VMEM).
    try:
        phys = pltpu.get_tpu_info().vmem_capacity_bytes
    except Exception:
        phys = 64 << 20          # assume the smallest generation
    return int(min(phys // 3, 24 << 20))


def _pick_tb(b, H_pad, W_pad, budget):
    per_img = (2 * 3 * H_pad * W_pad * 2          # bf16 input block, double-buffered
               + 2 * NOUT_PAD * W_pad * 4         # f32 output block, double-buffered
               + HIDDEN * W_pad * 4               # feature-scratch slice
               + HIDDEN * HC * W_pad * 4)         # conv chunk intermediate
    tb = max(1, budget // max(per_img, 1))
    tb = int(min(tb, 8, b))
    if b >= 2:
        tb = min(tb, max(1, b // 2))   # keep >= 2 grid steps (v7x has 2 TensorCores)
    return int(tb)


def text_model_forward(images, w1, b1, w2, b2):
    """images: (b, 3, H, W) float32 in [0, 1]  ->  logits (b, NOUTPUT, W)."""
    b, c, H, W = images.shape
    assert c == 3 and 1 <= b <= 16384 and 12 <= H <= 512 and 15 < W <= 2048

    H_pad = pl.cdiv(H, HC) * HC
    W_pad = pl.cdiv(W, 128) * 128
    # Edge padding keeps the per-image min/max identical to the unpadded image.
    if (H_pad, W_pad) != (H, W):
        images = jnp.pad(images, ((0, 0), (0, 0), (0, H_pad - H), (0, W_pad - W)),
                         mode="edge")
    # bf16 input DMA halves HBM traffic / VMEM footprint; compute stays f32 in-kernel.
    images = images.astype(jnp.bfloat16)

    budget = _vmem_budget_bytes()
    TB = _pick_tb(b, H_pad, W_pad, budget)
    b_pad = pl.cdiv(b, TB) * TB
    if b_pad != b:
        images = jnp.pad(images, ((0, b_pad - b), (0, 0), (0, 0), (0, 0)))

    # ---- host-side (static) weight preparation ----
    f32 = jnp.float32
    eye = jnp.eye(HC, dtype=f32)
    # w1big[d*HC + h, c*HC + h] = w1[d, c]  -> one matmul covers an HC-row chunk.
    w1big = jnp.einsum("dc,hk->dhck", w1.astype(f32), eye).reshape(HIDDEN * HC, 3 * HC)
    b1rep = jnp.repeat(b1.reshape(HIDDEN, 1).astype(f32), HC, axis=0)        # (HIDDEN*HC, 1)
    rsrep = jnp.repeat(w1.sum(axis=1).reshape(HIDDEN, 1).astype(f32), HC, axis=0)
    # mean-over-H folded into W2; NOUTPUT padded 95 -> 128 with zero rows.
    w2p = jnp.zeros((NOUT_PAD, HIDDEN), f32).at[:NOUTPUT, :].set(w2.astype(f32) / H)
    b2p = jnp.zeros((NOUT_PAD, 1), f32).at[:NOUTPUT, :].set(b2.reshape(NOUTPUT, 1).astype(f32))

    in_block = TB * 3 * H_pad * W_pad * 2
    out_block = TB * NOUT_PAD * W_pad * 4
    scratch = HIDDEN * TB * W_pad * 4
    vmem_limit = int(min(max(2 * (in_block + out_block) + scratch + (8 << 20),
                             32 << 20), 48 << 20))

    out = pl.pallas_call(
        _make_text_kernel(TB, H, H_pad, W_pad),
        out_shape=jax.ShapeDtypeStruct((b_pad, NOUT_PAD, W_pad), jnp.float32),
        grid_spec=pltpu.PrefetchScalarGridSpec(
            num_scalar_prefetch=0,
            grid=(b_pad // TB,),
            in_specs=[
                pl.BlockSpec((TB, 3, H_pad, W_pad), lambda i: (i, 0, 0, 0)),   # images
                pl.BlockSpec((HIDDEN * HC, 3 * HC), lambda i: (0, 0)),         # W1 (block-diag)
                pl.BlockSpec((HIDDEN * HC, 1),      lambda i: (0, 0)),         # b1 (replicated)
                pl.BlockSpec((HIDDEN * HC, 1),      lambda i: (0, 0)),         # rowsum(W1)
                pl.BlockSpec((NOUT_PAD, HIDDEN),    lambda i: (0, 0)),         # W2 (/H, padded)
                pl.BlockSpec((NOUT_PAD, 1),         lambda i: (0, 0)),         # b2 (padded)
            ],
            out_specs=pl.BlockSpec((TB, NOUT_PAD, W_pad), lambda i: (i, 0, 0)),
            scratch_shapes=[pltpu.VMEM((HIDDEN, TB * W_pad), jnp.float32)],
        ),
        compiler_params=pltpu.CompilerParams(
            dimension_semantics=("parallel",),
            vmem_limit_bytes=vmem_limit),
    )(images, w1big, b1rep, rsrep, w2p, b2p)

    return out[:b, :NOUTPUT, :W]


def text_model_forward_ref(images, w1, b1, w2, b2):
    """Pure-JAX reference of the same forward pass."""
    x = images - images.min(axis=(1, 2, 3), keepdims=True)
    x = x / (x.max(axis=(1, 2, 3), keepdims=True) + 1e-6)
    hid = jnp.einsum("dc,bchw->bdhw", w1, x) + b1.reshape(1, HIDDEN, 1, 1)
    hid = jnp.maximum(hid, 0.0)
    feat = hid.mean(axis=2)                                    # (b, HIDDEN, W)
    out = jnp.einsum("nd,bdw->bnw", w2, feat) + b2.reshape(1, NOUTPUT, 1)
    return out


if __name__ == "__main__":
    key = jax.random.PRNGKey(0)
    k_img, k_w1, k_b1, k_w2, k_b2, k_img2 = jax.random.split(key, 6)

    w1 = jax.random.normal(k_w1, (HIDDEN, 3), jnp.float32) * 0.5     # 1x1 conv weight
    b1 = jax.random.normal(k_b1, (HIDDEN, 1), jnp.float32) * 0.1
    w2 = jax.random.normal(k_w2, (NOUTPUT, HIDDEN), jnp.float32) * 0.2
    b2 = jax.random.normal(k_b2, (NOUTPUT, 1), jnp.float32) * 0.1

    # --- config 1: aligned shapes, one image per grid step (2 grid steps) ---
    b, H, W = 2, 16, 128
    images = jax.random.uniform(k_img, (b, 3, H, W), jnp.float32, 0.0, 1.0)
    out = jax.block_until_ready(text_model_forward(images, w1, b1, w2, b2))
    assert out.shape == (b, NOUTPUT, W), out.shape
    ref = text_model_forward_ref(images, w1, b1, w2, b2)
    np.testing.assert_allclose(np.asarray(out), np.asarray(ref), rtol=2e-2, atol=2e-2)

    # --- config 2: ragged H/W, two images per grid step, batch padding ---
    b, H, W = 5, 20, 144
    images = jax.random.uniform(k_img2, (b, 3, H, W), jnp.float32, 0.0, 1.0)
    out = jax.block_until_ready(text_model_forward(images, w1, b1, w2, b2))
    assert out.shape == (b, NOUTPUT, W), out.shape
    ref = text_model_forward_ref(images, w1, b1, w2, b2)
    np.testing.assert_allclose(np.asarray(out), np.asarray(ref), rtol=2e-2, atol=2e-2)

    print("KERNEL_OK")
</pallas_src>

<mosaic_0001>
module attributes {stable_mosaic.version = 11 : i64} {
  func.func @kernel(%arg0: i32, %arg1: memref<1x3x16x128xbf16, #tpu.memory_space<vmem>>, %arg2: memref<512x48xf32, #tpu.memory_space<vmem>>, %arg3: memref<512x1xf32, #tpu.memory_space<vmem>>, %arg4: memref<512x1xf32, #tpu.memory_space<vmem>>, %arg5: memref<128x32xf32, #tpu.memory_space<vmem>>, %arg6: memref<128x1xf32, #tpu.memory_space<vmem>>, %arg7: memref<1x128x128xf32, #tpu.memory_space<vmem>>, %arg8: memref<32x128xf32, #tpu.memory_space<vmem>>) attributes {dimension_semantics = [#tpu.dimension_semantics<parallel>], iteration_bounds = array<i64: 2>, scalar_prefetch = 0 : i64, scratch_operands = 1 : i64, tpu.core_type = #tpu.core_type<tc>, window_params = [{transform_indices = @transform_0, window_bounds = array<i64: 1, 3, 16, 128>}, {pipeline_mode = #tpu.pipeline_mode<synchronous>, transform_indices = @transform_1, window_bounds = array<i64: 512, 48>}, {pipeline_mode = #tpu.pipeline_mode<synchronous>, transform_indices = @transform_2, window_bounds = array<i64: 512, 1>}, {pipeline_mode = #tpu.pipeline_mode<synchronous>, transform_indices = @transform_3, window_bounds = array<i64: 512, 1>}, {pipeline_mode = #tpu.pipeline_mode<synchronous>, transform_indices = @transform_4, window_bounds = array<i64: 128, 32>}, {pipeline_mode = #tpu.pipeline_mode<synchronous>, transform_indices = @transform_5, window_bounds = array<i64: 128, 1>}, {transform_indices = @transform_6, window_bounds = array<i64: 1, 128, 128>}]} {
    %cst = arith.constant 0.000000e+00 : f32
    %0 = vector.broadcast %cst : f32 to vector<32x128xf32>
    %c0 = arith.constant 0 : index
    %c0_0 = arith.constant 0 : index
    %1 = vector.load %arg8[%c0, %c0_0] : memref<32x128xf32, #tpu.memory_space<vmem>>, vector<32x128xf32>
    tpu.vector_store %arg8[%c0, %c0_0], %0 {strides = array<i32>} : memref<32x128xf32, #tpu.memory_space<vmem>>, vector<32x128xf32>,
    %c0_1 = arith.constant 0 : index
    %c0_2 = arith.constant 0 : index
    %2 = vector.load %arg2[%c0_1, %c0_2] : memref<512x48xf32, #tpu.memory_space<vmem>>, vector<512x48xf32>
    %c0_3 = arith.constant 0 : index
    %c0_4 = arith.constant 0 : index
    %3 = vector.load %arg3[%c0_3, %c0_4] : memref<512x1xf32, #tpu.memory_space<vmem>>, vector<512x1xf32>
    %c0_5 = arith.constant 0 : index
    %c0_6 = arith.constant 0 : index
    %4 = vector.load %arg4[%c0_5, %c0_6] : memref<512x1xf32, #tpu.memory_space<vmem>>, vector<512x1xf32>
    %cst_7 = arith.constant 0x7F800000 : f32
    %5 = vector.broadcast %cst_7 : f32 to vector<1x1xf32>
    %cst_8 = arith.constant 0xFF800000 : f32
    %6 = vector.broadcast %cst_8 : f32 to vector<1x1xf32>
    %c0_i32 = arith.constant 0 : i32
    %c0_i32_9 = arith.constant 0 : i32
    %c16_i32 = arith.constant 16 : i32
    %7 = arith.muli %c0_i32_9, %c16_i32 : i32
    %8 = tpu.assume_multiple %7, 16 : i32
    %c0_i32_10 = arith.constant 0 : i32
    %c0_i32_11 = arith.constant 0 : i32
    %c0_i32_12 = arith.constant 0 : i32
    %9 = tpu.memref_slice %arg1[%c0_i32, %c0_i32_10, %c0_i32_11, %c0_i32_12] : memref<1x3x16x128xbf16, #tpu.memory_space<vmem>> -> memref<1x3x16x128xbf16, #tpu.memory_space<vmem>>
    %10 = tpu.memref_squeeze %9 : memref<1x3x16x128xbf16, #tpu.memory_space<vmem>> -> memref<3x16x128xbf16, #tpu.memory_space<vmem>>
    %c0_13 = arith.constant 0 : index
    %11 = arith.index_cast %8 : i32 to index
    %c0_14 = arith.constant 0 : index
    %12 = vector.load %10[%c0_13, %11, %c0_14] : memref<3x16x128xbf16, #tpu.memory_space<vmem>>, vector<3x16x128xbf16>
    %13 = arith.extf %12 : vector<3x16x128xbf16> to vector<3x16x128xf32>
    %14 = vector.shape_cast %13 : vector<3x16x128xf32> to vector<48x128xf32>
    %cst_15 = arith.constant dense<0x7F800000> : vector<48xf32>
    %15 = vector.multi_reduction <minimumf>, %14, %cst_15 [1] : vector<48x128xf32> to vector<48xf32>
    %16 = vector.shape_cast %15 : vector<48xf32> to vector<48x1xf32>
    %cst_16 = arith.constant dense<0x7F800000> : vector<1xf32>
    %17 = vector.multi_reduction <minimumf>, %16, %cst_16 [0] : vector<48x1xf32> to vector<1xf32>
    %18 = vector.shape_cast %17 : vector<1xf32> to vector<1x1xf32>
    %19 = arith.minimumf %5, %18 : vector<1x1xf32>
    %cst_17 = arith.constant dense<0xFF800000> : vector<48xf32>
    %20 = vector.multi_reduction <maximumf>, %14, %cst_17 [1] : vector<48x128xf32> to vector<48xf32>
    %21 = vector.shape_cast %20 : vector<48xf32> to vector<48x1xf32>
    %cst_18 = arith.constant dense<0xFF800000> : vector<1xf32>
    %22 = vector.multi_reduction <maximumf>, %21, %cst_18 [0] : vector<48x1xf32> to vector<1xf32>
    %23 = vector.shape_cast %22 : vector<1xf32> to vector<1x1xf32>
    %24 = arith.maximumf %6, %23 : vector<1x1xf32>
    %c1_i32 = arith.constant 1 : i32
    %25 = arith.subf %24, %19 : vector<1x1xf32>
    %cst_19 = arith.constant 9.99999997E-7 : f32
    %26 = vector.broadcast %cst_19 : f32 to vector<1x1xf32>
    %27 = arith.addf %25, %26 : vector<1x1xf32>
    %28 = tpu.reciprocal %27 {approx = true} : vector<1x1xf32> -> vector<1x1xf32>
    %29 = vector.broadcast %28 : vector<1x1xf32> to vector<512x48xf32>
    %30 = arith.mulf %2, %29 : vector<512x48xf32>
    %31 = arith.mulf %28, %19 : vector<1x1xf32>
    %32 = vector.broadcast %31 : vector<1x1xf32> to vector<512x1xf32>
    %33 = arith.mulf %32, %4 : vector<512x1xf32>
    %34 = arith.subf %3, %33 : vector<512x1xf32>
    %c0_i32_20 = arith.constant 0 : i32
    %c0_i32_21 = arith.constant 0 : i32
    %c16_i32_22 = arith.constant 16 : i32
    %35 = arith.muli %c0_i32_21, %c16_i32_22 : i32
    %36 = tpu.assume_multiple %35, 16 : i32
    %c0_i32_23 = arith.constant 0 : i32
    %c0_i32_24 = arith.constant 0 : i32
    %c0_i32_25 = arith.constant 0 : i32
    %37 = tpu.memref_slice %arg1[%c0_i32_20, %c0_i32_23, %c0_i32_24, %c0_i32_25] : memref<1x3x16x128xbf16, #tpu.memory_space<vmem>> -> memref<1x3x16x128xbf16, #tpu.memory_space<vmem>>
    %38 = tpu.memref_squeeze %37 : memref<1x3x16x128xbf16, #tpu.memory_space<vmem>> -> memref<3x16x128xbf16, #tpu.memory_space<vmem>>
    %c0_26 = arith.constant 0 : index
    %39 = arith.index_cast %36 : i32 to index
    %c0_27 = arith.constant 0 : index
    %40 = vector.load %38[%c0_26, %39, %c0_27] : memref<3x16x128xbf16, #tpu.memory_space<vmem>>, vector<3x16x128xbf16>
    %41 = arith.extf %40 : vector<3x16x128xbf16> to vector<3x16x128xf32>
    %42 = vector.shape_cast %41 : vector<3x16x128xf32> to vector<48x128xf32>
    %cst_28 = arith.constant dense<0.000000e+00> : vector<512x128xf32>
    %43 = tpu.matmul %30, %42, %cst_28 {dimension_numbers = #tpu.dot_dimension_numbers<[1], [0], [0], [1], [0, 0, 1, 1], [], []>} : vector<512x48xf32>, vector<48x128xf32>, vector<512x128xf32> -> vector<512x128xf32>
    %44 = vector.broadcast %34 : vector<512x1xf32> to vector<512x128xf32>
    %45 = arith.addf %43, %44 : vector<512x128xf32>
    %cst_29 = arith.constant 0.000000e+00 : f32
    %46 = vector.broadcast %cst_29 : f32 to vector<512x128xf32>
    %47 = arith.maximumf %45, %46 : vector<512x128xf32>
    %48 = vector.shape_cast %47 : vector<512x128xf32> to vector<32x16x128xf32>
    %cst_30 = arith.constant dense<0.000000e+00> : vector<32x128xf32>
    %49 = vector.multi_reduction <add>, %48, %cst_30 [1] : vector<32x16x128xf32> to vector<32x128xf32>
    %c0_31 = arith.constant 0 : index
    %c0_32 = arith.constant 0 : index
    %50 = vector.load %arg8[%c0_31, %c0_32] : memref<32x128xf32, #tpu.memory_space<vmem>>, vector<32x128xf32>
    %51 = arith.addf %50, %49 : vector<32x128xf32>
    %c0_33 = arith.constant 0 : index
    %c0_34 = arith.constant 0 : index
    %52 = vector.load %arg8[%c0_33, %c0_34] : memref<32x128xf32, #tpu.memory_space<vmem>>, vector<32x128xf32>
    tpu.vector_store %arg8[%c0_33, %c0_34], %51 {strides = array<i32>} : memref<32x128xf32, #tpu.memory_space<vmem>>, vector<32x128xf32>,
    %c1_i32_35 = arith.constant 1 : i32
    %c0_36 = arith.constant 0 : index
    %c0_37 = arith.constant 0 : index
    %53 = vector.load %arg5[%c0_36, %c0_37] : memref<128x32xf32, #tpu.memory_space<vmem>>, vector<128x32xf32>
    %c0_38 = arith.constant 0 : index
    %c0_39 = arith.constant 0 : index
    %54 = vector.load %arg8[%c0_38, %c0_39] : memref<32x128xf32, #tpu.memory_space<vmem>>, vector<32x128xf32>
    %cst_40 = arith.constant dense<0.000000e+00> : vector<128x128xf32>
    %55 = tpu.matmul %53, %54, %cst_40 {dimension_numbers = #tpu.dot_dimension_numbers<[1], [0], [0], [1], [0, 0, 1, 1], [], []>} : vector<128x32xf32>, vector<32x128xf32>, vector<128x128xf32> -> vector<128x128xf32>
    %c0_41 = arith.constant 0 : index
    %c0_42 = arith.constant 0 : index
    %56 = vector.load %arg6[%c0_41, %c0_42] : memref<128x1xf32, #tpu.memory_space<vmem>>, vector<128x1xf32>
    %57 = vector.broadcast %56 : vector<128x1xf32> to vector<128x128xf32>
    %58 = arith.addf %55, %57 : vector<128x128xf32>
    %c0_43 = arith.constant 0 : index
    %c0_44 = arith.constant 0 : index
    %c0_45 = arith.constant 0 : index
    %59 = vector.load %arg7[%c0_43, %c0_44, %c0_45] : memref<1x128x128xf32, #tpu.memory_space<vmem>>, vector<1x128x128xf32>
    %60 = vector.shape_cast %59 : vector<1x128x128xf32> to vector<128x128xf32>
    %61 = vector.shape_cast %58 : vector<128x128xf32> to vector<1x128x128xf32>
    tpu.vector_store %arg7[%c0_43, %c0_44, %c0_45], %61 {strides = array<i32>} : memref<1x128x128xf32, #tpu.memory_space<vmem>>, vector<1x128x128xf32>,
    return
  }
  func.func @transform_0(%arg0: i32) -> (i32, i32, i32, i32) {
    %c0_i32 = arith.constant 0 : i32
    %c0_i32_0 = arith.constant 0 : i32
    %c0_i32_1 = arith.constant 0 : i32
    %c0_i32_2 = arith.constant 0 : i32
    return %arg0, %c0_i32, %c0_i32_0, %c0_i32_1 : i32, i32, i32, i32
  }
  func.func @transform_1(%arg0: i32) -> (i32, i32) {
    %c0_i32 = arith.constant 0 : i32
    %c0_i32_0 = arith.constant 0 : i32
    %c0_i32_1 = arith.constant 0 : i32
    return %c0_i32, %c0_i32_0 : i32, i32
  }
  func.func @transform_2(%arg0: i32) -> (i32, i32) {
    %c0_i32 = arith.constant 0 : i32
    %c0_i32_0 = arith.constant 0 : i32
    %c0_i32_1 = arith.constant 0 : i32
    return %c0_i32, %c0_i32_0 : i32, i32
  }
  func.func @transform_3(%arg0: i32) -> (i32, i32) {
    %c0_i32 = arith.constant 0 : i32
    %c0_i32_0 = arith.constant 0 : i32
    %c0_i32_1 = arith.constant 0 : i32
    return %c0_i32, %c0_i32_0 : i32, i32
  }
  func.func @transform_4(%arg0: i32) -> (i32, i32) {
    %c0_i32 = arith.constant 0 : i32
    %c0_i32_0 = arith.constant 0 : i32
    %c0_i32_1 = arith.constant 0 : i32
    return %c0_i32, %c0_i32_0 : i32, i32
  }
  func.func @transform_5(%arg0: i32) -> (i32, i32) {
    %c0_i32 = arith.constant 0 : i32
    %c0_i32_0 = arith.constant 0 : i32
    %c0_i32_1 = arith.constant 0 : i32
    return %c0_i32, %c0_i32_0 : i32, i32
  }
  func.func @transform_6(%arg0: i32) -> (i32, i32, i32) {
    %c0_i32 = arith.constant 0 : i32
    %c0_i32_0 = arith.constant 0 : i32
    %c0_i32_1 = arith.constant 0 : i32
    return %arg0, %c0_i32, %c0_i32_0 : i32, i32, i32
  }
}

</mosaic_0001>

<llo_original>
// kernel: tpu_custom_call.1
$region0: #{tpu_custom_call.1}
  #allocation0 [shape = 'u32[]', space=smem, size = 0x4, offset = 0x4, fixed_abs, tag = 'smem constant byte address 0x4 - core index']
  #allocation1 [shape = 'u32[144,128]{1,0:T(1,128)}', space=vmem, size = 0x12000, scoped, tag = 'internal scratch']
  #allocation2 [shape = 'f32[32,128]{1,0:T(8,128)}', space=vmem, size = 0x4000, scoped, tag = 'scratch operand']
  %s0 = inlined_call_operand.vmem [shape: bf16[2,3,16,128], index: 0, kind: input, shape index: {}]
  %s1 = inlined_call_operand.vmem [shape: f32[512,48], index: 1, kind: input, shape index: {}]
  %s2 = inlined_call_operand.vmem [shape: f32[512,1], index: 2, kind: input, shape index: {}]
  %s3 = inlined_call_operand.vmem [shape: f32[512,1], index: 3, kind: input, shape index: {}]
  %s4 = inlined_call_operand.vmem [shape: f32[128,32], index: 4, kind: input, shape index: {}]
  %s5 = inlined_call_operand.vmem [shape: f32[128,1], index: 5, kind: input, shape index: {}]
  %s6 = inlined_call_operand.hbm [shape: f32[2,128,128], index: 6, kind: output, shape index: {}]
  %s7 = sld [smem:[#allocation0]]
  $region57: #{tpu_custom_call.1} parent=0
    _
  %s9 = ssub.s32 1, %s7
  %s10 = scalar_select 0, %s9, %s7
  $region1: #{tpu_custom_call.1} parent=0
    #allocation3 [shape = 'u8[131072]{0}', space=vmem, size = 0x20000, scoped, tag = 'output window, operand 0']
    #allocation4 [shape = 's32[2]{0}', space=sflag, size = 0x8, scoped, tag = 'scoped memory for tpu_custom_call.1']
    %11 = vsyncpa [#allocation4], 0
    %s12 = scalar_lea.sflag [#allocation4], 1
    %13 = vsyncpa %s12, 0
    loop: start=0, step=1, limit=4
    $region2: #{tpu_custom_call.1} parent=1 // loop_pre_header
      _
    $region3: #{tpu_custom_call.1} parent=1 // loop_header
      %s15 = sphi 0, %s19
      %p16 = scmp.ge.s32.totalorder %s15, 4
      %s25 = sphi 0, %s27
      %s28 = sphi 0, %s25
      %s29 = sphi 0, %s28
      %s45 = sphi 0, %s29
      %s49 = sphi 0, %s49
      %s51 = sphi 0, %s49
      %s52 = sphi 0, %s51
      %s66 = sphi 0, %s52
      %s70 = sphi 0, %s70
      %s72 = sphi 0, %s70
      %s73 = sphi 0, %s72
      %s87 = sphi 0, %s73
      %s91 = sphi 0, %s91
      %s93 = sphi 0, %s91
      %s94 = sphi 0, %s93
      %s108 = sphi 0, %s94
      %s112 = sphi 0, %s112
      %s114 = sphi 0, %s112
      %s115 = sphi 0, %s114
      %s129 = sphi 0, %s115
      %s133 = sphi 0, %s133
      %s135 = sphi 0, %s133
      %s136 = sphi 0, %s135
      %s150 = sphi 0, %s136
      %s156 = sphi 0, %s158
      %s159 = sphi 0, %s156
      %s160 = sphi 0, %s159
      %s176 = sphi 0, %s160
    $region4: #{tpu_custom_call.1} parent=1 // loop_header_branch
      %18 = sbr.rel (%p16) target = $region8
    $region5: #{tpu_custom_call.1} parent=1 // loop_body
      %s20 = ssub.s32 %s15, 1
      %s21 = ssub.s32 %s15, 2
      %s22 = sadd.s32 %s15, 1
      %s23 = ssub.s32 %s15, %s22
      %p24 = scmp.eq.s32.totalorder %s23, 0
      %s26 = sadd.s32 %s25, 1
      %s27 = scalar_select %p24, %s25, %s26
      %p30 = pneg %p24
      %p31 = scmp.eq.s32.totalorder %s15, 1
      %p32 = por %p30, %p31
      %p33 = scmp.ne.s32.totalorder %s25, %s28
      %p34 = scmp.eq.s32.totalorder %s15, 0
      %p35 = por %p33, %p34
      %p36 = scmp.ne.s32.totalorder %s25, %s28
      %p37 = scmp.eq.s32.totalorder %s20, 1
      %p38 = por %p36, %p37
      %p39 = scmp.ne.s32.totalorder %s28, %s29
      %p40 = scmp.eq.s32.totalorder %s20, 0
      %p41 = por %p39, %p40
      %p42 = scmp.ne.s32.totalorder %s28, %s29
      %p43 = scmp.eq.s32.totalorder %s21, 1
      %p44 = por %p42, %p43
      %p46 = scmp.ne.s32.totalorder %s29, %s45
      %p47 = scmp.eq.s32.totalorder %s21, 0
      %p48 = por %p46, %p47
      %s50 = sadd.s32 %s49, 1
      %p53 = scmp.eq.s32.totalorder %s15, 1
      %p54 = scmp.ne.s32.totalorder %s49, %s51
      %p55 = scmp.eq.s32.totalorder %s15, 0
      %p56 = por %p54, %p55
      %p57 = scmp.ne.s32.totalorder %s49, %s51
      %p58 = scmp.eq.s32.totalorder %s20, 1
      %p59 = por %p57, %p58
      %p60 = scmp.ne.s32.totalorder %s51, %s52
      %p61 = scmp.eq.s32.totalorder %s20, 0
      %p62 = por %p60, %p61
      %p63 = scmp.ne.s32.totalorder %s51, %s52
      %p64 = scmp.eq.s32.totalorder %s21, 1
      %p65 = por %p63, %p64
      %p67 = scmp.ne.s32.totalorder %s52, %s66
      %p68 = scmp.eq.s32.totalorder %s21, 0
      %p69 = por %p67, %p68
      %s71 = sadd.s32 %s70, 1
      %p74 = scmp.eq.s32.totalorder %s15, 1
      %p75 = scmp.ne.s32.totalorder %s70, %s72
      %p76 = scmp.eq.s32.totalorder %s15, 0
      %p77 = por %p75, %p76
      %p78 = scmp.ne.s32.totalorder %s70, %s72
      %p79 = scmp.eq.s32.totalorder %s20, 1
      %p80 = por %p78, %p79
      %p81 = scmp.ne.s32.totalorder %s72, %s73
      %p82 = scmp.eq.s32.totalorder %s20, 0
      %p83 = por %p81, %p82
      %p84 = scmp.ne.s32.totalorder %s72, %s73
      %p85 = scmp.eq.s32.totalorder %s21, 1
      %p86 = por %p84, %p85
      %p88 = scmp.ne.s32.totalorder %s73, %s87
      %p89 = scmp.eq.s32.totalorder %s21, 0
      %p90 = por %p88, %p89
      %s92 = sadd.s32 %s91, 1
      %p95 = scmp.eq.s32.totalorder %s15, 1
      %p96 = scmp.ne.s32.totalorder %s91, %s93
      %p97 = scmp.eq.s32.totalorder %s15, 0
      %p98 = por %p96, %p97
      %p99 = scmp.ne.s32.totalorder %s91, %s93
      %p100 = scmp.eq.s32.totalorder %s20, 1
      %p101 = por %p99, %p100
      %p102 = scmp.ne.s32.totalorder %s93, %s94
      %p103 = scmp.eq.s32.totalorder %s20, 0
      %p104 = por %p102, %p103
      %p105 = scmp.ne.s32.totalorder %s93, %s94
      %p106 = scmp.eq.s32.totalorder %s21, 1
      %p107 = por %p105, %p106
      %p109 = scmp.ne.s32.totalorder %s94, %s108
      %p110 = scmp.eq.s32.totalorder %s21, 0
      %p111 = por %p109, %p110
      %s113 = sadd.s32 %s112, 1
      %p116 = scmp.eq.s32.totalorder %s15, 1
      %p117 = scmp.ne.s32.totalorder %s112, %s114
      %p118 = scmp.eq.s32.totalorder %s15, 0
      %p119 = por %p117, %p118
      %p120 = scmp.ne.s32.totalorder %s112, %s114
      %p121 = scmp.eq.s32.totalorder %s20, 1
      %p122 = por %p120, %p121
      %p123 = scmp.ne.s32.totalorder %s114, %s115
      %p124 = scmp.eq.s32.totalorder %s20, 0
      %p125 = por %p123, %p124
      %p126 = scmp.ne.s32.totalorder %s114, %s115
      %p127 = scmp.eq.s32.totalorder %s21, 1
      %p128 = por %p126, %p127
      %p130 = scmp.ne.s32.totalorder %s115, %s129
      %p131 = scmp.eq.s32.totalorder %s21, 0
      %p132 = por %p130, %p131
      %s134 = sadd.s32 %s133, 1
      %p137 = scmp.eq.s32.totalorder %s15, 1
      %p138 = scmp.ne.s32.totalorder %s133, %s135
      %p139 = scmp.eq.s32.totalorder %s15, 0
      %p140 = por %p138, %p139
      %p141 = scmp.ne.s32.totalorder %s133, %s135
      %p142 = scmp.eq.s32.totalorder %s20, 1
      %p143 = por %p141, %p142
      %p144 = scmp.ne.s32.totalorder %s135, %s136
      %p145 = scmp.eq.s32.totalorder %s20, 0
      %p146 = por %p144, %p145
      %p147 = scmp.ne.s32.totalorder %s135, %s136
      %p148 = scmp.eq.s32.totalorder %s21, 1
      %p149 = por %p147, %p148
      %p151 = scmp.ne.s32.totalorder %s136, %s150
      %p152 = scmp.eq.s32.totalorder %s21, 0
      %p153 = por %p151, %p152
      %s154 = ssub.s32 %s15, %s22
      %p155 = scmp.eq.s32.totalorder %s154, 0
      %s157 = sadd.s32 %s156, 1
      %s158 = scalar_select %p155, %s156, %s157
      %p161 = pneg %p155
      %p162 = scmp.eq.s32.totalorder %s15, 1
      %p163 = por %p161, %p162
      %p164 = scmp.ne.s32.totalorder %s156, %s159
      %p165 = scmp.eq.s32.totalorder %s15, 0
      %p166 = por %p164, %p165
      %p167 = scmp.ne.s32.totalorder %s156, %s159
      %p168 = scmp.eq.s32.totalorder %s20, 1
      %p169 = por %p167, %p168
      %p170 = scmp.ne.s32.totalorder %s159, %s160
      %p171 = scmp.eq.s32.totalorder %s20, 0
      %p172 = por %p170, %p171
      %p173 = scmp.ne.s32.totalorder %s159, %s160
      %p174 = scmp.eq.s32.totalorder %s21, 1
      %p175 = por %p173, %p174
      %p177 = scmp.ne.s32.totalorder %s160, %s176
      %p178 = scmp.eq.s32.totalorder %s21, 0
      %p179 = por %p177, %p178
      %p180 = scmp.le.s32.totalorder 1, %s15
      %p181 = scmp.lt.s32.totalorder %s15, 3
      %p182 = pnand %p180, %p181
      %p183 = pneg %p182
      // Predicated region
      $region9: #{tpu_custom_call.1} parent=5 // pred_check
        _
      $region10: #{tpu_custom_call.1} parent=5 // pred_check_branch
        %185 = sbr.rel (%p182) target = $region12
      $region11: #{tpu_custom_call.1} parent=5 // pred_region
        %s186 = ssub.s32 %s15, 1
        // Predicated region
        $region13: #{tpu_custom_call.1} parent=11 // pred_check
          %p187 = pneg %p62
        $region14: #{tpu_custom_call.1} parent=11 // pred_check_branch
          %189 = sbr.rel (%p187) target = $region16
        $region15: #{tpu_custom_call.1} parent=11 // pred_region
          _
        $region16: #{tpu_custom_call.1} parent=11 // pred_fallthru
          _
        // Predicated region
        $region17: #{tpu_custom_call.1} parent=11 // pred_check
          %p190 = pneg %p83
        $region18: #{tpu_custom_call.1} parent=11 // pred_check_branch
          %192 = sbr.rel (%p190) target = $region20
        $region19: #{tpu_custom_call.1} parent=11 // pred_region
          _
        $region20: #{tpu_custom_call.1} parent=11 // pred_fallthru
          _
        // Predicated region
        $region21: #{tpu_custom_call.1} parent=11 // pred_check
          %p193 = pneg %p104
        $region22: #{tpu_custom_call.1} parent=11 // pred_check_branch
          %195 = sbr.rel (%p193) target = $region24
        $region23: #{tpu_custom_call.1} parent=11 // pred_region
          _
        $region24: #{tpu_custom_call.1} parent=11 // pred_fallthru
          _
        // Predicated region
        $region25: #{tpu_custom_call.1} parent=11 // pred_check
          %p196 = pneg %p125
        $region26: #{tpu_custom_call.1} parent=11 // pred_check_branch
          %198 = sbr.rel (%p196) target = $region28
        $region27: #{tpu_custom_call.1} parent=11 // pred_region
          _
        $region28: #{tpu_custom_call.1} parent=11 // pred_fallthru
          _
        // Predicated region
        $region29: #{tpu_custom_call.1} parent=11 // pred_check
          %p199 = pneg %p146
        $region30: #{tpu_custom_call.1} parent=11 // pred_check_branch
          %201 = sbr.rel (%p199) target = $region32
        $region31: #{tpu_custom_call.1} parent=11 // pred_region
          _
        $region32: #{tpu_custom_call.1} parent=11 // pred_fallthru
          _
      $region12: #{tpu_custom_call.1} parent=5 // pred_fallthru
        _
      %p202 = scmp.lt.s32.totalorder %s15, 2
      // Predicated region
      $region33: #{tpu_custom_call.1} parent=5 // pred_check
        %p203 = pneg %p202
      $region34: #{tpu_custom_call.1} parent=5 // pred_check_branch
        %205 = sbr.rel (%p203) target = $region36
      $region35: #{tpu_custom_call.1} parent=5 // pred_region
        // Predicated region
        $region37: #{tpu_custom_call.1} parent=35 // pred_check
          %p206 = pneg %p35
        $region38: #{tpu_custom_call.1} parent=35 // pred_check_branch
          %208 = sbr.rel (%p206) target = $region40
        $region39: #{tpu_custom_call.1} parent=35 // pred_region
          %p209 = scmp.lt.s32.totalorder %s15, 1
          %s210 = scalar_select %p209, %s15, 1
          %s211 = smul.addr %s210, 6
          %s212 = smul.addr %s211, 4
          %s213 = scalar_lea.vmem %s0, %s212
        $region40: #{tpu_custom_call.1} parent=35 // pred_fallthru
          _
      $region36: #{tpu_custom_call.1} parent=5 // pred_fallthru
        _
      %p214 = scmp.le.s32.totalorder 1, %s15
      %p215 = scmp.lt.s32.totalorder %s15, 3
      %p216 = pnand %p214, %p215
      %p217 = pneg %p216
      // Predicated region
      $region41: #{tpu_custom_call.1} parent=5 // pred_check
        _
      $region42: #{tpu_custom_call.1} parent=5 // pred_check_branch
        %219 = sbr.rel (%p216) target = $region44
      $region43: #{tpu_custom_call.1} parent=5 // pred_region
        %s220 = ssub.s32 %s15, 1
        %p221 = scmp.lt.s32.totalorder %s20, 1
        %s222 = scalar_select %p221, %s20, 1
        %s223 = smul.addr %s222, 6
        %s224 = smul.addr %s223, 4
        %s225 = scalar_lea.vmem %s0, %s224
        %p226 = pneg %p41
        %p227 = pneg %p38
        %p228 = pneg %p62
        %p229 = pneg %p59
        %p230 = pneg %p83
        %p231 = pneg %p80
        %p232 = pneg %p104
        %p233 = pneg %p101
        %p234 = pneg %p125
        %p235 = pneg %p122
        %p236 = pneg %p146
        %p237 = pneg %p143
        %p238 = pneg %p172
        %p239 = pneg %p169
        %s240 = sand.u32 %s159, 1
        %s241 = scalar_lea.sflag [#allocation4], %s240
        %s242 = sand.u32 %s159, 1
        %s243 = smul.addr %s242, 128
        %s244 = scalar_lea.vmem [#allocation3], %s243
        %p245 = scmp.lt.s32.totalorder %s20, 1
        %s246 = scalar_select %p245, %s20, 1
        %s247 = smul.addr %s246, 6
        %s248 = smul.addr %s247, 4
        %s249 = scalar_lea.vmem %s0, %s248
        %250 = vst [vmem:[#allocation2] sm:$0xff] 0.0
        %251 = vst [vmem:[#allocation2 + $0x8] sm:$0xff] 0.0
        %252 = vst [vmem:[#allocation2 + $0x10] sm:$0xff] 0.0
        %253 = vst [vmem:[#allocation2 + $0x18] sm:$0xff] 0.0
        %v254 = vld [vmem:[%s1] sm:$0xff]
        %v255 = vld [vmem:[%s1 + $0x8] sm:$0xff]
        %v256 = vld [vmem:[%s1 + $0x10] sm:$0xff]
        %v257 = vld [vmem:[%s1 + $0x18] sm:$0xff]
        %v258 = vld [vmem:[%s1 + $0x20] sm:$0xff]
        %v259 = vld [vmem:[%s1 + $0x28] sm:$0xff]
        %v260 = vld [vmem:[%s1 + $0x30] sm:$0xff]
        %v261 = vld [vmem:[%s1 + $0x38] sm:$0xff]
        %v262 = vld [vmem:[%s1 + $0x40] sm:$0xff]
        %v263 = vld [vmem:[%s1 + $0x48] sm:$0xff]
        %v264 = vld [vmem:[%s1 + $0x50] sm:$0xff]
        %v265 = vld [vmem:[%s1 + $0x58] sm:$0xff]
        %v266 = vld [vmem:[%s1 + $0x60] sm:$0xff]
        %v267 = vld [vmem:[%s1 + $0x68] sm:$0xff]
        %v268 = vld [vmem:[%s1 + $0x70] sm:$0xff]
        %v269 = vld [vmem:[%s1 + $0x78] sm:$0xff]
        %v270 = vld [vmem:[%s1 + $0x80] sm:$0xff]
        %v271 = vld [vmem:[%s1 + $0x88] sm:$0xff]
        %v272 = vld [vmem:[%s1 + $0x90] sm:$0xff]
        %v273 = vld [vmem:[%s1 + $0x98] sm:$0xff]
        %v274 = vld [vmem:[%s1 + $0xa0] sm:$0xff]
        %v275 = vld [vmem:[%s1 + $0xa8] sm:$0xff]
        %v276 = vld [vmem:[%s1 + $0xb0] sm:$0xff]
        %v277 = vld [vmem:[%s1 + $0xb8] sm:$0xff]
        %v278 = vld [vmem:[%s1 + $0xc0] sm:$0xff]
        %v279 = vld [vmem:[%s1 + $0xc8] sm:$0xff]
        %v280 = vld [vmem:[%s1 + $0xd0] sm:$0xff]
        %v281 = vld [vmem:[%s1 + $0xd8] sm:$0xff]
        %v282 = vld [vmem:[%s1 + $0xe0] sm:$0xff]
        %v283 = vld [vmem:[%s1 + $0xe8] sm:$0xff]
        %v284 = vld [vmem:[%s1 + $0xf0] sm:$0xff]
        %v285 = vld [vmem:[%s1 + $0xf8] sm:$0xff]
        %v286 = vld [vmem:[%s1 + $0x100] sm:$0xff]
        %v287 = vld [vmem:[%s1 + $0x108] sm:$0xff]
        %v288 = vld [vmem:[%s1 + $0x110] sm:$0xff]
        %v289 = vld [vmem:[%s1 + $0x118] sm:$0xff]
        %v290 = vld [vmem:[%s1 + $0x120] sm:$0xff]
        %v291 = vld [vmem:[%s1 + $0x128] sm:$0xff]
        %v292 = vld [vmem:[%s1 + $0x130] sm:$0xff]
        %v293 = vld [vmem:[%s1 + $0x138] sm:$0xff]
        %v294 = vld [vmem:[%s1 + $0x140] sm:$0xff]
        %v295 = vld [vmem:[%s1 + $0x148] sm:$0xff]
        %v296 = vld [vmem:[%s1 + $0x150] sm:$0xff]
        %v297 = vld [vmem:[%s1 + $0x158] sm:$0xff]
        %v298 = vld [vmem:[%s1 + $0x160] sm:$0xff]
        %v299 = vld [vmem:[%s1 + $0x168] sm:$0xff]
        %v300 = vld [vmem:[%s1 + $0x170] sm:$0xff]
        %v301 = vld [vmem:[%s1 + $0x178] sm:$0xff]
        %v302 = vld [vmem:[%s1 + $0x180] sm:$0xff]
        %v303 = vld [vmem:[%s1 + $0x188] sm:$0xff]
        %v304 = vld [vmem:[%s1 + $0x190] sm:$0xff]
        %v305 = vld [vmem:[%s1 + $0x198] sm:$0xff]
        %v306 = vld [vmem:[%s1 + $0x1a0] sm:$0xff]
        %v307 = vld [vmem:[%s1 + $0x1a8] sm:$0xff]
        %v308 = vld [vmem:[%s1 + $0x1b0] sm:$0xff]
        %v309 = vld [vmem:[%s1 + $0x1b8] sm:$0xff]
        %v310 = vld [vmem:[%s1 + $0x1c0] sm:$0xff]
        %v311 = vld [vmem:[%s1 + $0x1c8] sm:$0xff]
        %v312 = vld [vmem:[%s1 + $0x1d0] sm:$0xff]
        %v313 = vld [vmem:[%s1 + $0x1d8] sm:$0xff]
        %v314 = vld [vmem:[%s1 + $0x1e0] sm:$0xff]
        %v315 = vld [vmem:[%s1 + $0x1e8] sm:$0xff]
        %v316 = vld [vmem:[%s1 + $0x1f0] sm:$0xff]
        %v317 = vld [vmem:[%s1 + $0x1f8] sm:$0xff]
        %v318 = vld [vmem:[%s2] sm:$0xff]
        %v319 = vld [vmem:[%s2 + $0x8] sm:$0xff]
        %v320 = vld [vmem:[%s2 + $0x10] sm:$0xff]
        %v321 = vld [vmem:[%s2 + $0x18] sm:$0xff]
        %v322 = vld [vmem:[%s2 + $0x20] sm:$0xff]
        %v323 = vld [vmem:[%s2 + $0x28] sm:$0xff]
        %v324 = vld [vmem:[%s2 + $0x30] sm:$0xff]
        %v325 = vld [vmem:[%s2 + $0x38] sm:$0xff]
        %v326 = vld [vmem:[%s2 + $0x40] sm:$0xff]
        %v327 = vld [vmem:[%s2 + $0x48] sm:$0xff]
        %v328 = vld [vmem:[%s2 + $0x50] sm:$0xff]
        %v329 = vld [vmem:[%s2 + $0x58] sm:$0xff]
        %v330 = vld [vmem:[%s2 + $0x60] sm:$0xff]
        %v331 = vld [vmem:[%s2 + $0x68] sm:$0xff]
        %v332 = vld [vmem:[%s2 + $0x70] sm:$0xff]
        %v333 = vld [vmem:[%s2 + $0x78] sm:$0xff]
        %v334 = vld [vmem:[%s2 + $0x80] sm:$0xff]
        %v335 = vld [vmem:[%s2 + $0x88] sm:$0xff]
        %v336 = vld [vmem:[%s2 + $0x90] sm:$0xff]
        %v337 = vld [vmem:[%s2 + $0x98] sm:$0xff]
        %v338 = vld [vmem:[%s2 + $0xa0] sm:$0xff]
        %v339 = vld [vmem:[%s2 + $0xa8] sm:$0xff]
        %v340 = vld [vmem:[%s2 + $0xb0] sm:$0xff]
        %v341 = vld [vmem:[%s2 + $0xb8] sm:$0xff]
        %v342 = vld [vmem:[%s2 + $0xc0] sm:$0xff]
        %v343 = vld [vmem:[%s2 + $0xc8] sm:$0xff]
        %v344 = vld [vmem:[%s2 + $0xd0] sm:$0xff]
        %v345 = vld [vmem:[%s2 + $0xd8] sm:$0xff]
        %v346 = vld [vmem:[%s2 + $0xe0] sm:$0xff]
        %v347 = vld [vmem:[%s2 + $0xe8] sm:$0xff]
        %v348 = vld [vmem:[%s2 + $0xf0] sm:$0xff]
        %v349 = vld [vmem:[%s2 + $0xf8] sm:$0xff]
        %v350 = vld [vmem:[%s2 + $0x100] sm:$0xff]
        %v351 = vld [vmem:[%s2 + $0x108] sm:$0xff]
        %v352 = vld [vmem:[%s2 + $0x110] sm:$0xff]
        %v353 = vld [vmem:[%s2 + $0x118] sm:$0xff]
        %v354 = vld [vmem:[%s2 + $0x120] sm:$0xff]
        %v355 = vld [vmem:[%s2 + $0x128] sm:$0xff]
        %v356 = vld [vmem:[%s2 + $0x130] sm:$0xff]
        %v357 = vld [vmem:[%s2 + $0x138] sm:$0xff]
        %v358 = vld [vmem:[%s2 + $0x140] sm:$0xff]
        %v359 = vld [vmem:[%s2 + $0x148] sm:$0xff]
        %v360 = vld [vmem:[%s2 + $0x150] sm:$0xff]
        %v361 = vld [vmem:[%s2 + $0x158] sm:$0xff]
        %v362 = vld [vmem:[%s2 + $0x160] sm:$0xff]
        %v363 = vld [vmem:[%s2 + $0x168] sm:$0xff]
        %v364 = vld [vmem:[%s2 + $0x170] sm:$0xff]
        %v365 = vld [vmem:[%s2 + $0x178] sm:$0xff]
        %v366 = vld [vmem:[%s2 + $0x180] sm:$0xff]
        %v367 = vld [vmem:[%s2 + $0x188] sm:$0xff]
        %v368 = vld [vmem:[%s2 + $0x190] sm:$0xff]
        %v369 = vld [vmem:[%s2 + $0x198] sm:$0xff]
        %v370 = vld [vmem:[%s2 + $0x1a0] sm:$0xff]
        %v371 = vld [vmem:[%s2 + $0x1a8] sm:$0xff]
        %v372 = vld [vmem:[%s2 + $0x1b0] sm:$0xff]
        %v373 = vld [vmem:[%s2 + $0x1b8] sm:$0xff]
        %v374 = vld [vmem:[%s2 + $0x1c0] sm:$0xff]
        %v375 = vld [vmem:[%s2 + $0x1c8] sm:$0xff]
        %v376 = vld [vmem:[%s2 + $0x1d0] sm:$0xff]
        %v377 = vld [vmem:[%s2 + $0x1d8] sm:$0xff]
        %v378 = vld [vmem:[%s2 + $0x1e0] sm:$0xff]
        %v379 = vld [vmem:[%s2 + $0x1e8] sm:$0xff]
        %v380 = vld [vmem:[%s2 + $0x1f0] sm:$0xff]
        %v381 = vld [vmem:[%s2 + $0x1f8] sm:$0xff]
        %v382 = vld [vmem:[%s3] sm:$0xff]
        %v383 = vld [vmem:[%s3 + $0x8] sm:$0xff]
        %v384 = vld [vmem:[%s3 + $0x10] sm:$0xff]
        %v385 = vld [vmem:[%s3 + $0x18] sm:$0xff]
        %v386 = vld [vmem:[%s3 + $0x20] sm:$0xff]
        %v387 = vld [vmem:[%s3 + $0x28] sm:$0xff]
        %v388 = vld [vmem:[%s3 + $0x30] sm:$0xff]
        %v389 = vld [vmem:[%s3 + $0x38] sm:$0xff]
        %v390 = vld [vmem:[%s3 + $0x40] sm:$0xff]
        %v391 = vld [vmem:[%s3 + $0x48] sm:$0xff]
        %v392 = vld [vmem:[%s3 + $0x50] sm:$0xff]
        %v393 = vld [vmem:[%s3 + $0x58] sm:$0xff]
        %v394 = vld [vmem:[%s3 + $0x60] sm:$0xff]
        %v395 = vld [vmem:[%s3 + $0x68] sm:$0xff]
        %v396 = vld [vmem:[%s3 + $0x70] sm:$0xff]
        %v397 = vld [vmem:[%s3 + $0x78] sm:$0xff]
        %v398 = vld [vmem:[%s3 + $0x80] sm:$0xff]
        %v399 = vld [vmem:[%s3 + $0x88] sm:$0xff]
        %v400 = vld [vmem:[%s3 + $0x90] sm:$0xff]
        %v401 = vld [vmem:[%s3 + $0x98] sm:$0xff]
        %v402 = vld [vmem:[%s3 + $0xa0] sm:$0xff]
        %v403 = vld [vmem:[%s3 + $0xa8] sm:$0xff]
        %v404 = vld [vmem:[%s3 + $0xb0] sm:$0xff]
        %v405 = vld [vmem:[%s3 + $0xb8] sm:$0xff]
        %v406 = vld [vmem:[%s3 + $0xc0] sm:$0xff]
        %v407 = vld [vmem:[%s3 + $0xc8] sm:$0xff]
        %v408 = vld [vmem:[%s3 + $0xd0] sm:$0xff]
        %v409 = vld [vmem:[%s3 + $0xd8] sm:$0xff]
        %v410 = vld [vmem:[%s3 + $0xe0] sm:$0xff]
        %v411 = vld [vmem:[%s3 + $0xe8] sm:$0xff]
        %v412 = vld [vmem:[%s3 + $0xf0] sm:$0xff]
        %v413 = vld [vmem:[%s3 + $0xf8] sm:$0xff]
        %v414 = vld [vmem:[%s3 + $0x100] sm:$0xff]
        %v415 = vld [vmem:[%s3 + $0x108] sm:$0xff]
        %v416 = vld [vmem:[%s3 + $0x110] sm:$0xff]
        %v417 = vld [vmem:[%s3 + $0x118] sm:$0xff]
        %v418 = vld [vmem:[%s3 + $0x120] sm:$0xff]
        %v419 = vld [vmem:[%s3 + $0x128] sm:$0xff]
        %v420 = vld [vmem:[%s3 + $0x130] sm:$0xff]
        %v421 = vld [vmem:[%s3 + $0x138] sm:$0xff]
        %v422 = vld [vmem:[%s3 + $0x140] sm:$0xff]
        %v423 = vld [vmem:[%s3 + $0x148] sm:$0xff]
        %v424 = vld [vmem:[%s3 + $0x150] sm:$0xff]
        %v425 = vld [vmem:[%s3 + $0x158] sm:$0xff]
        %v426 = vld [vmem:[%s3 + $0x160] sm:$0xff]
        %v427 = vld [vmem:[%s3 + $0x168] sm:$0xff]
        %v428 = vld [vmem:[%s3 + $0x170] sm:$0xff]
        %v429 = vld [vmem:[%s3 + $0x178] sm:$0xff]
        %v430 = vld [vmem:[%s3 + $0x180] sm:$0xff]
        %v431 = vld [vmem:[%s3 + $0x188] sm:$0xff]
        %v432 = vld [vmem:[%s3 + $0x190] sm:$0xff]
        %v433 = vld [vmem:[%s3 + $0x198] sm:$0xff]
        %v434 = vld [vmem:[%s3 + $0x1a0] sm:$0xff]
        %v435 = vld [vmem:[%s3 + $0x1a8] sm:$0xff]
        %v436 = vld [vmem:[%s3 + $0x1b0] sm:$0xff]
        %v437 = vld [vmem:[%s3 + $0x1b8] sm:$0xff]
        %v438 = vld [vmem:[%s3 + $0x1c0] sm:$0xff]
        %v439 = vld [vmem:[%s3 + $0x1c8] sm:$0xff]
        %v440 = vld [vmem:[%s3 + $0x1d0] sm:$0xff]
        %v441 = vld [vmem:[%s3 + $0x1d8] sm:$0xff]
        %v442 = vld [vmem:[%s3 + $0x1e0] sm:$0xff]
        %v443 = vld [vmem:[%s3 + $0x1e8] sm:$0xff]
        %v444 = vld [vmem:[%s3 + $0x1f0] sm:$0xff]
        %v445 = vld [vmem:[%s3 + $0x1f8] sm:$0xff]
        %v446 = vld [vmem:[%s249] sm:$0xf]
        %v447 = vld [vmem:[%s249 + $0x4] sm:$0xf]
        %v448 = vld [vmem:[%s249 + $0x8] sm:$0xf]
        %v449 = vld [vmem:[%s249 + $0xc] sm:$0xf]
        %v450 = vld [vmem:[%s249 + $0x10] sm:$0xf]
        %v451 = vld [vmem:[%s249 + $0x14] sm:$0xf]
        %v452 = vunpack.c.l.bf16 %v446
        %v453 = vunpack.c.l.bf16 %v447
        %v454 = vunpack.c.l.bf16 %v448
        %v455 = vunpack.c.l.bf16 %v449
        %v456 = vunpack.c.l.bf16 %v450
        %v457 = vunpack.c.l.bf16 %v451
        %458 = vmin.xlane.f32.xlu0 %v452
        %v459 = vpop.xlane.xlu0 %458
        %460 = vmin.xlane.f32.xlu0 %v453
        %v461 = vpop.xlane.xlu0 %460
        %462 = vmin.xlane.f32.xlu0 %v454
        %v463 = vpop.xlane.xlu0 %462
        %464 = vmin.xlane.f32.xlu0 %v455
        %v465 = vpop.xlane.xlu0 %464
        %466 = vmin.xlane.f32.xlu0 %v456
        %v467 = vpop.xlane.xlu0 %466
        %468 = vmin.xlane.f32.xlu0 %v457
        %v469 = vpop.xlane.xlu0 %468
        %v470 = vmin.f32 %v459, %v467
        %v471 = vmin.f32 %v461, %v469
        %v472 = vmin.f32 %v470, %v471
        %v473 = vmin.f32 %v463, %v465
        %v474 = vmin.f32 %v472, %v473
        %v475 = vrot.slane %v474, 4
        %v476 = vmin.f32 %v474, %v475
        %v477 = vrot.slane %v476, 2
        %v478 = vmin.f32 %v476, %v477
        %v479 = vrot.slane %v478, 1
        %v480 = vmin.f32 %v478, %v479
        %481 = vmax.xlane.f32.xlu0 %v452
        %v482 = vpop.xlane.xlu0 %481
        %483 = vmax.xlane.f32.xlu0 %v453
        %v484 = vpop.xlane.xlu0 %483
        %485 = vmax.xlane.f32.xlu0 %v454
        %v486 = vpop.xlane.xlu0 %485
        %487 = vmax.xlane.f32.xlu0 %v455
        %v488 = vpop.xlane.xlu0 %487
        %489 = vmax.xlane.f32.xlu0 %v456
        %v490 = vpop.xlane.xlu0 %489
        %491 = vmax.xlane.f32.xlu0 %v457
        %v492 = vpop.xlane.xlu0 %491
        %v493 = vmax.f32 %v482, %v490
        %v494 = vmax.f32 %v484, %v492
        %v495 = vmax.f32 %v493, %v494
        %v496 = vmax.f32 %v486, %v488
        %v497 = vmax.f32 %v495, %v496
        %v498 = vrot.slane %v497, 4
        %v499 = vmax.f32 %v497, %v498
        %v500 = vrot.slane %v499, 2
        %v501 = vmax.f32 %v499, %v500
        %v502 = vrot.slane %v501, 1
        %v503 = vmax.f32 %v501, %v502
        %v504 = vsub.f32 %v503, %v480
        %v505 = vadd.f32 %v504, 1e-06
        %v506 = vrcp.pop %v505
        %v507 = vmul.f32 %v254, %v506
        %v508 = vmul.f32 %v255, %v506
        %v509 = vmul.f32 %v256, %v506
        %v510 = vmul.f32 %v257, %v506
        %v511 = vmul.f32 %v258, %v506
        %v512 = vmul.f32 %v259, %v506
        %v513 = vmul.f32 %v260, %v506
        %v514 = vmul.f32 %v261, %v506
        %v515 = vmul.f32 %v262, %v506
        %v516 = vmul.f32 %v263, %v506
        %v517 = vmul.f32 %v264, %v506
        %v518 = vmul.f32 %v265, %v506
        %v519 = vmul.f32 %v266, %v506
        %v520 = vmul.f32 %v267, %v506
        %v521 = vmul.f32 %v268, %v506
        %v522 = vmul.f32 %v269, %v506
        %v523 = vmul.f32 %v270, %v506
        %v524 = vmul.f32 %v271, %v506
        %v525 = vmul.f32 %v272, %v506
        %v526 = vmul.f32 %v273, %v506
        %v527 = vmul.f32 %v274, %v506
        %v528 = vmul.f32 %v275, %v506
        %v529 = vmul.f32 %v276, %v506
        %v530 = vmul.f32 %v277, %v506
        %v531 = vmul.f32 %v278, %v506
        %v532 = vmul.f32 %v279, %v506
        %v533 = vmul.f32 %v280, %v506
        %v534 = vmul.f32 %v281, %v506
        %v535 = vmul.f32 %v282, %v506
        %v536 = vmul.f32 %v283, %v506
        %v537 = vmul.f32 %v284, %v506
        %v538 = vmul.f32 %v285, %v506
        %v539 = vmul.f32 %v286, %v506
        %v540 = vmul.f32 %v287, %v506
        %v541 = vmul.f32 %v288, %v506
        %v542 = vmul.f32 %v289, %v506
        %v543 = vmul.f32 %v290, %v506
        %v544 = vmul.f32 %v291, %v506
        %v545 = vmul.f32 %v292, %v506
        %v546 = vmul.f32 %v293, %v506
        %v547 = vmul.f32 %v294, %v506
        %v548 = vmul.f32 %v295, %v506
        %v549 = vmul.f32 %v296, %v506
        %v550 = vmul.f32 %v297, %v506
        %v551 = vmul.f32 %v298, %v506
        %v552 = vmul.f32 %v299, %v506
        %v553 = vmul.f32 %v300, %v506
        %v554 = vmul.f32 %v301, %v506
        %v555 = vmul.f32 %v302, %v506
        %v556 = vmul.f32 %v303, %v506
        %v557 = vmul.f32 %v304, %v506
        %v558 = vmul.f32 %v305, %v506
        %v559 = vmul.f32 %v306, %v506
        %v560 = vmul.f32 %v307, %v506
        %v561 = vmul.f32 %v308, %v506
        %v562 = vmul.f32 %v309, %v506
        %v563 = vmul.f32 %v310, %v506
        %v564 = vmul.f32 %v311, %v506
        %v565 = vmul.f32 %v312, %v506
        %v566 = vmul.f32 %v313, %v506
        %v567 = vmul.f32 %v314, %v506
        %v568 = vmul.f32 %v315, %v506
        %v569 = vmul.f32 %v316, %v506
        %v570 = vmul.f32 %v317, %v506
        %v571 = vmul.f32 %v506, %v480
        %v572 = vmul.f32 %v571, %v382
        %v573 = vmul.f32 %v571, %v383
        %v574 = vmul.f32 %v571, %v384
        %v575 = vmul.f32 %v571, %v385
        %v576 = vmul.f32 %v571, %v386
        %v577 = vmul.f32 %v571, %v387
        %v578 = vmul.f32 %v571, %v388
        %v579 = vmul.f32 %v571, %v389
        %v580 = vmul.f32 %v571, %v390
        %v581 = vmul.f32 %v571, %v391
        %v582 = vmul.f32 %v571, %v392
        %v583 = vmul.f32 %v571, %v393
        %v584 = vmul.f32 %v571, %v394
        %v585 = vmul.f32 %v571, %v395
        %v586 = vmul.f32 %v571, %v396
        %v587 = vmul.f32 %v571, %v397
        %v588 = vmul.f32 %v571, %v398
        %v589 = vmul.f32 %v571, %v399
        %v590 = vmul.f32 %v571, %v400
        %v591 = vmul.f32 %v571, %v401
        %v592 = vmul.f32 %v571, %v402
        %v593 = vmul.f32 %v571, %v403
        %v594 = vmul.f32 %v571, %v404
        %v595 = vmul.f32 %v571, %v405
        %v596 = vmul.f32 %v571, %v406
        %v597 = vmul.f32 %v571, %v407
        %v598 = vmul.f32 %v571, %v408
        %v599 = vmul.f32 %v571, %v409
        %v600 = vmul.f32 %v571, %v410
        %v601 = vmul.f32 %v571, %v411
        %v602 = vmul.f32 %v571, %v412
        %v603 = vmul.f32 %v571, %v413
        %v604 = vmul.f32 %v571, %v414
        %v605 = vmul.f32 %v571, %v415
        %v606 = vmul.f32 %v571, %v416
        %v607 = vmul.f32 %v571, %v417
        %v608 = vmul.f32 %v571, %v418
        %v609 = vmul.f32 %v571, %v419
        %v610 = vmul.f32 %v571, %v420
        %v611 = vmul.f32 %v571, %v421
        %v612 = vmul.f32 %v571, %v422
        %v613 = vmul.f32 %v571, %v423
        %v614 = vmul.f32 %v571, %v424
        %v615 = vmul.f32 %v571, %v425
        %v616 = vmul.f32 %v571, %v426
        %v617 = vmul.f32 %v571, %v427
        %v618 = vmul.f32 %v571, %v428
        %v619 = vmul.f32 %v571, %v429
        %v620 = vmul.f32 %v571, %v430
        %v621 = vmul.f32 %v571, %v431
        %v622 = vmul.f32 %v571, %v432
        %v623 = vmul.f32 %v571, %v433
        %v624 = vmul.f32 %v571, %v434
        %v625 = vmul.f32 %v571, %v435
        %v626 = vmul.f32 %v571, %v436
        %v627 = vmul.f32 %v571, %v437
        %v628 = vmul.f32 %v571, %v438
        %v629 = vmul.f32 %v571, %v439
        %v630 = vmul.f32 %v571, %v440
        %v631 = vmul.f32 %v571, %v441
        %v632 = vmul.f32 %v571, %v442
        %v633 = vmul.f32 %v571, %v443
        %v634 = vmul.f32 %v571, %v444
        %v635 = vmul.f32 %v571, %v445
        %v636 = vsub.f32 %v318, %v572
        %v637 = vsub.f32 %v319, %v573
        %v638 = vsub.f32 %v320, %v574
        %v639 = vsub.f32 %v321, %v575
        %v640 = vsub.f32 %v322, %v576
        %v641 = vsub.f32 %v323, %v577
        %v642 = vsub.f32 %v324, %v578
        %v643 = vsub.f32 %v325, %v579
        %v644 = vsub.f32 %v326, %v580
        %v645 = vsub.f32 %v327, %v581
        %v646 = vsub.f32 %v328, %v582
        %v647 = vsub.f32 %v329, %v583
        %v648 = vsub.f32 %v330, %v584
        %v649 = vsub.f32 %v331, %v585
        %v650 = vsub.f32 %v332, %v586
        %v651 = vsub.f32 %v333, %v587
        %v652 = vsub.f32 %v334, %v588
        %v653 = vsub.f32 %v335, %v589
        %v654 = vsub.f32 %v336, %v590
        %v655 = vsub.f32 %v337, %v591
        %v656 = vsub.f32 %v338, %v592
        %v657 = vsub.f32 %v339, %v593
        %v658 = vsub.f32 %v340, %v594
        %v659 = vsub.f32 %v341, %v595
        %v660 = vsub.f32 %v342, %v596
        %v661 = vsub.f32 %v343, %v597
        %v662 = vsub.f32 %v344, %v598
        %v663 = vsub.f32 %v345, %v599
        %v664 = vsub.f32 %v346, %v600
        %v665 = vsub.f32 %v347, %v601
        %v666 = vsub.f32 %v348, %v602
        %v667 = vsub.f32 %v349, %v603
        %v668 = vsub.f32 %v350, %v604
        %v669 = vsub.f32 %v351, %v605
        %v670 = vsub.f32 %v352, %v606
        %v671 = vsub.f32 %v353, %v607
        %v672 = vsub.f32 %v354, %v608
        %v673 = vsub.f32 %v355, %v609
        %v674 = vsub.f32 %v356, %v610
        %v675 = vsub.f32 %v357, %v611
        %v676 = vsub.f32 %v358, %v612
        %v677 = vsub.f32 %v359, %v613
        %v678 = vsub.f32 %v360, %v614
        %v679 = vsub.f32 %v361, %v615
        %v680 = vsub.f32 %v362, %v616
        %v681 = vsub.f32 %v363, %v617
        %v682 = vsub.f32 %v364, %v618
        %v683 = vsub.f32 %v365, %v619
        %v684 = vsub.f32 %v366, %v620
        %v685 = vsub.f32 %v367, %v621
        %v686 = vsub.f32 %v368, %v622
        %v687 = vsub.f32 %v369, %v623
        %v688 = vsub.f32 %v370, %v624
        %v689 = vsub.f32 %v371, %v625
        %v690 = vsub.f32 %v372, %v626
        %v691 = vsub.f32 %v373, %v627
        %v692 = vsub.f32 %v374, %v628
        %v693 = vsub.f32 %v375, %v629
        %v694 = vsub.f32 %v376, %v630
        %v695 = vsub.f32 %v377, %v631
        %v696 = vsub.f32 %v378, %v632
        %v697 = vsub.f32 %v379, %v633
        %v698 = vsub.f32 %v380, %v634
        %v699 = vsub.f32 %v381, %v635
        %701 = vset.pattern.permute.xlu0 0
        %702 = vperm.xlu0 %701, %v636
        %v703 = vpop.permute.xlu0 %702
        %706 = vset.pattern.permute.xlu0 0
        %707 = vperm.xlu0 %706, %v637
        %v708 = vpop.permute.xlu0 %707
        %711 = vset.pattern.permute.xlu0 0
        %712 = vperm.xlu0 %711, %v638
        %v713 = vpop.permute.xlu0 %712
        %716 = vset.pattern.permute.xlu0 0
        %717 = vperm.xlu0 %716, %v639
        %v718 = vpop.permute.xlu0 %717
        %721 = vset.pattern.permute.xlu0 0
        %722 = vperm.xlu0 %721, %v640
        %v723 = vpop.permute.xlu0 %722
        %726 = vset.pattern.permute.xlu0 0
        %727 = vperm.xlu0 %726, %v641
        %v728 = vpop.permute.xlu0 %727
        %731 = vset.pattern.permute.xlu0 0
        %732 = vperm.xlu0 %731, %v642
        %v733 = vpop.permute.xlu0 %732
        %736 = vset.pattern.permute.xlu0 0
        %737 = vperm.xlu0 %736, %v643
        %v738 = vpop.permute.xlu0 %737
        %741 = vset.pattern.permute.xlu0 0
        %742 = vperm.xlu0 %741, %v644
        %v743 = vpop.permute.xlu0 %742
        %746 = vset.pattern.permute.xlu0 0
        %747 = vperm.xlu0 %746, %v645
        %v748 = vpop.permute.xlu0 %747
        %751 = vset.pattern.permute.xlu0 0
        %752 = vperm.xlu0 %751, %v646
        %v753 = vpop.permute.xlu0 %752
        %756 = vset.pattern.permute.xlu0 0
        %757 = vperm.xlu0 %756, %v647
        %v758 = vpop.permute.xlu0 %757
        %761 = vset.pattern.permute.xlu0 0
        %762 = vperm.xlu0 %761, %v648
        %v763 = vpop.permute.xlu0 %762
        %766 = vset.pattern.permute.xlu0 0
        %767 = vperm.xlu0 %766, %v649
        %v768 = vpop.permute.xlu0 %767
        %771 = vset.pattern.permute.xlu0 0
        %772 = vperm.xlu0 %771, %v650
        %v773 = vpop.permute.xlu0 %772
        %776 = vset.pattern.permute.xlu0 0
        %777 = vperm.xlu0 %776, %v651
        %v778 = vpop.permute.xlu0 %777
        %781 = vset.pattern.permute.xlu0 0
        %782 = vperm.xlu0 %781, %v652
        %v783 = vpop.permute.xlu0 %782
        %786 = vset.pattern.permute.xlu0 0
        %787 = vperm.xlu0 %786, %v653
        %v788 = vpop.permute.xlu0 %787
        %791 = vset.pattern.permute.xlu0 0
        %792 = vperm.xlu0 %791, %v654
        %v793 = vpop.permute.xlu0 %792
        %796 = vset.pattern.permute.xlu0 0
        %797 = vperm.xlu0 %796, %v655
        %v798 = vpop.permute.xlu0 %797
        %801 = vset.pattern.permute.xlu0 0
        %802 = vperm.xlu0 %801, %v656
        %v803 = vpop.permute.xlu0 %802
        %806 = vset.pattern.permute.xlu0 0
        %807 = vperm.xlu0 %806, %v657
        %v808 = vpop.permute.xlu0 %807
        %811 = vset.pattern.permute.xlu0 0
        %812 = vperm.xlu0 %811, %v658
        %v813 = vpop.permute.xlu0 %812
        %816 = vset.pattern.permute.xlu0 0
        %817 = vperm.xlu0 %816, %v659
        %v818 = vpop.permute.xlu0 %817
        %821 = vset.pattern.permute.xlu0 0
        %822 = vperm.xlu0 %821, %v660
        %v823 = vpop.permute.xlu0 %822
        %826 = vset.pattern.permute.xlu0 0
        %827 = vperm.xlu0 %826, %v661
        %v828 = vpop.permute.xlu0 %827
        %831 = vset.pattern.permute.xlu0 0
        %832 = vperm.xlu0 %831, %v662
        %v833 = vpop.permute.xlu0 %832
        %836 = vset.pattern.permute.xlu0 0
        %837 = vperm.xlu0 %836, %v663
        %v838 = vpop.permute.xlu0 %837
        %841 = vset.pattern.permute.xlu0 0
        %842 = vperm.xlu0 %841, %v664
        %v843 = vpop.permute.xlu0 %842
        %846 = vset.pattern.permute.xlu0 0
        %847 = vperm.xlu0 %846, %v665
        %v848 = vpop.permute.xlu0 %847
        %851 = vset.pattern.permute.xlu0 0
        %852 = vperm.xlu0 %851, %v666
        %v853 = vpop.permute.xlu0 %852
        %856 = vset.pattern.permute.xlu0 0
        %857 = vperm.xlu0 %856, %v667
        %v858 = vpop.permute.xlu0 %857
        %861 = vset.pattern.permute.xlu0 0
        %862 = vperm.xlu0 %861, %v668
        %v863 = vpop.permute.xlu0 %862
        %866 = vset.pattern.permute.xlu0 0
        %867 = vperm.xlu0 %866, %v669
        %v868 = vpop.permute.xlu0 %867
        %871 = vset.pattern.permute.xlu0 0
        %872 = vperm.xlu0 %871, %v670
        %v873 = vpop.permute.xlu0 %872
        %876 = vset.pattern.permute.xlu0 0
        %877 = vperm.xlu0 %876, %v671
        %v878 = vpop.permute.xlu0 %877
        %881 = vset.pattern.permute.xlu0 0
        %882 = vperm.xlu0 %881, %v672
        %v883 = vpop.permute.xlu0 %882
        %886 = vset.pattern.permute.xlu0 0
        %887 = vperm.xlu0 %886, %v673
        %v888 = vpop.permute.xlu0 %887
        %891 = vset.pattern.permute.xlu0 0
        %892 = vperm.xlu0 %891, %v674
        %v893 = vpop.permute.xlu0 %892
        %896 = vset.pattern.permute.xlu0 0
        %897 = vperm.xlu0 %896, %v675
        %v898 = vpop.permute.xlu0 %897
        %901 = vset.pattern.permute.xlu0 0
        %902 = vperm.xlu0 %901, %v676
        %v903 = vpop.permute.xlu0 %902
        %906 = vset.pattern.permute.xlu0 0
        %907 = vperm.xlu0 %906, %v677
        %v908 = vpop.permute.xlu0 %907
        %911 = vset.pattern.permute.xlu0 0
        %912 = vperm.xlu0 %911, %v678
        %v913 = vpop.permute.xlu0 %912
        %916 = vset.pattern.permute.xlu0 0
        %917 = vperm.xlu0 %916, %v679
        %v918 = vpop.permute.xlu0 %917
        %921 = vset.pattern.permute.xlu0 0
        %922 = vperm.xlu0 %921, %v680
        %v923 = vpop.permute.xlu0 %922
        %926 = vset.pattern.permute.xlu0 0
        %927 = vperm.xlu0 %926, %v681
        %v928 = vpop.permute.xlu0 %927
        %931 = vset.pattern.permute.xlu0 0
        %932 = vperm.xlu0 %931, %v682
        %v933 = vpop.permute.xlu0 %932
        %936 = vset.pattern.permute.xlu0 0
        %937 = vperm.xlu0 %936, %v683
        %v938 = vpop.permute.xlu0 %937
        %941 = vset.pattern.permute.xlu0 0
        %942 = vperm.xlu0 %941, %v684
        %v943 = vpop.permute.xlu0 %942
        %946 = vset.pattern.permute.xlu0 0
        %947 = vperm.xlu0 %946, %v685
        %v948 = vpop.permute.xlu0 %947
        %951 = vset.pattern.permute.xlu0 0
        %952 = vperm.xlu0 %951, %v686
        %v953 = vpop.permute.xlu0 %952
        %956 = vset.pattern.permute.xlu0 0
        %957 = vperm.xlu0 %956, %v687
        %v958 = vpop.permute.xlu0 %957
        %961 = vset.pattern.permute.xlu0 0
        %962 = vperm.xlu0 %961, %v688
        %v963 = vpop.permute.xlu0 %962
        %966 = vset.pattern.permute.xlu0 0
        %967 = vperm.xlu0 %966, %v689
        %v968 = vpop.permute.xlu0 %967
        %971 = vset.pattern.permute.xlu0 0
        %972 = vperm.xlu0 %971, %v690
        %v973 = vpop.permute.xlu0 %972
        %976 = vset.pattern.permute.xlu0 0
        %977 = vperm.xlu0 %976, %v691
        %v978 = vpop.permute.xlu0 %977
        %981 = vset.pattern.permute.xlu0 0
        %982 = vperm.xlu0 %981, %v692
        %v983 = vpop.permute.xlu0 %982
        %986 = vset.pattern.permute.xlu0 0
        %987 = vperm.xlu0 %986, %v693
        %v988 = vpop.permute.xlu0 %987
        %991 = vset.pattern.permute.xlu0 0
        %992 = vperm.xlu0 %991, %v694
        %v993 = vpop.permute.xlu0 %992
        %996 = vset.pattern.permute.xlu0 0
        %997 = vperm.xlu0 %996, %v695
        %v998 = vpop.permute.xlu0 %997
        %1001 = vset.pattern.permute.xlu0 0
        %1002 = vperm.xlu0 %1001, %v696
        %v1003 = vpop.permute.xlu0 %1002
        %1006 = vset.pattern.permute.xlu0 0
        %1007 = vperm.xlu0 %1006, %v697
        %v1008 = vpop.permute.xlu0 %1007
        %1011 = vset.pattern.permute.xlu0 0
        %1012 = vperm.xlu0 %1011, %v698
        %v1013 = vpop.permute.xlu0 %1012
        %1016 = vset.pattern.permute.xlu0 0
        %1017 = vperm.xlu0 %1016, %v699
        %v1018 = vpop.permute.xlu0 %1017
        %vm1020 = vcmask 392192
        %v1022 = vsel %vm1020, %v507, 0
        %v1025 = vsel %vm1020, %v508, 0
        %v1028 = vsel %vm1020, %v509, 0
        %v1031 = vsel %vm1020, %v510, 0
        %v1034 = vsel %vm1020, %v511, 0
        %v1037 = vsel %vm1020, %v512, 0
        %v1040 = vsel %vm1020, %v513, 0
        %v1043 = vsel %vm1020, %v514, 0
        %v1046 = vsel %vm1020, %v515, 0
        %v1049 = vsel %vm1020, %v516, 0
        %v1052 = vsel %vm1020, %v517, 0
        %v1055 = vsel %vm1020, %v518, 0
        %v1058 = vsel %vm1020, %v519, 0
        %v1061 = vsel %vm1020, %v520, 0
        %v1064 = vsel %vm1020, %v521, 0
        %v1067 = vsel %vm1020, %v522, 0
        %v1070 = vsel %vm1020, %v523, 0
        %v1073 = vsel %vm1020, %v524, 0
        %v1076 = vsel %vm1020, %v525, 0
        %v1079 = vsel %vm1020, %v526, 0
        %v1082 = vsel %vm1020, %v527, 0
        %v1085 = vsel %vm1020, %v528, 0
        %v1088 = vsel %vm1020, %v529, 0
        %v1091 = vsel %vm1020, %v530, 0
        %v1094 = vsel %vm1020, %v531, 0
        %v1097 = vsel %vm1020, %v532, 0
        %v1100 = vsel %vm1020, %v533, 0
        %v1103 = vsel %vm1020, %v534, 0
        %v1106 = vsel %vm1020, %v535, 0
        %v1109 = vsel %vm1020, %v536, 0
        %v1112 = vsel %vm1020, %v537, 0
        %v1115 = vsel %vm1020, %v538, 0
        %v1118 = vsel %vm1020, %v539, 0
        %v1121 = vsel %vm1020, %v540, 0
        %v1124 = vsel %vm1020, %v541, 0
        %v1127 = vsel %vm1020, %v542, 0
        %v1130 = vsel %vm1020, %v543, 0
        %v1133 = vsel %vm1020, %v544, 0
        %v1136 = vsel %vm1020, %v545, 0
        %v1139 = vsel %vm1020, %v546, 0
        %v1142 = vsel %vm1020, %v547, 0
        %v1145 = vsel %vm1020, %v548, 0
        %v1148 = vsel %vm1020, %v549, 0
        %v1151 = vsel %vm1020, %v550, 0
        %v1154 = vsel %vm1020, %v551, 0
        %v1157 = vsel %vm1020, %v552, 0
        %v1160 = vsel %vm1020, %v553, 0
        %v1163 = vsel %vm1020, %v554, 0
        %v1166 = vsel %vm1020, %v555, 0
        %v1169 = vsel %vm1020, %v556, 0
        %v1172 = vsel %vm1020, %v557, 0
        %v1175 = vsel %vm1020, %v558, 0
        %v1178 = vsel %vm1020, %v559, 0
        %v1181 = vsel %vm1020, %v560, 0
        %v1184 = vsel %vm1020, %v561, 0
        %v1187 = vsel %vm1020, %v562, 0
        %v1190 = vsel %vm1020, %v563, 0
        %v1193 = vsel %vm1020, %v564, 0
        %v1196 = vsel %vm1020, %v565, 0
        %v1199 = vsel %vm1020, %v566, 0
        %v1202 = vsel %vm1020, %v567, 0
        %v1205 = vsel %vm1020, %v568, 0
        %v1208 = vsel %vm1020, %v569, 0
        %v1211 = vsel %vm1020, %v570, 0
        %1213 = vmatprep.subr.mxu0 0.0
        %1214 = vmatpush1.msra.mxu0 0.0
        %1215 = vmatprep.subr.mxu0 0.0
        %1216 = vmatpush1.msra.mxu0 0.0
        %1217 = vmatprep.subr.mxu0 0.0
        %1218 = vmatpush1.msra.mxu0 0.0
        %1219 = vmatprep.subr.mxu0 0.0
        %1220 = vmatpush1.msra.mxu0 0.0
        %1221 = vmatprep.subr.mxu0 0.0
        %1222 = vmatpush1.msra.mxu0 0.0
        %1223 = vmatprep.subr.mxu0 0.0
        %1224 = vmatpush1.msra.mxu0 0.0
        %1225 = vmatprep.subr.mxu0 0.0
        %1226 = vmatpush1.msra.mxu0 0.0
        %1227 = vmatprep.subr.mxu0 0.0
        %1228 = vmatpush1.msra.mxu0 0.0
        %1229 = vmatprep.subr.mxu0 0.0
        %1230 = vmatpush1.msra.mxu0 0.0
        %1231 = vmatprep.subr.mxu0 0.0
        %1232 = vmatpush1.msra.mxu0 0.0
        %1233 = vmatprep.subr.mxu0 0.0
        %1234 = vmatpush1.msra.mxu0 %v457
        %1235 = vmatprep.subr.mxu0 0.0
        %1236 = vmatpush1.msra.mxu0 %v456
        %1237 = vmatprep.subr.mxu0 0.0
        %1238 = vmatpush1.msra.mxu0 %v455
        %1239 = vmatprep.subr.mxu0 0.0
        %1240 = vmatpush1.msra.mxu0 %v454
        %1241 = vmatprep.subr.mxu0 0.0
        %1242 = vmatpush1.msra.mxu0 %v453
        %1243 = vmatprep.subr.mxu0 0.0
        %1244 = vmatpush1.msra.mxu0 %v452
        %1245 = vmatprep.subr.mxu0 0.0
        %1246 = vmatpush2.msra.mxu0 0.0
        %1247 = vmatprep.subr.mxu0 0.0
        %1248 = vmatpush2.msra.mxu0 0.0
        %1249 = vmatprep.subr.mxu0 0.0
        %1250 = vmatpush2.msra.mxu0 0.0
        %1251 = vmatprep.subr.mxu0 0.0
        %1252 = vmatpush2.msra.mxu0 0.0
        %1253 = vmatprep.subr.mxu0 0.0
        %1254 = vmatpush2.msra.mxu0 0.0
        %1255 = vmatprep.subr.mxu0 0.0
        %1256 = vmatpush2.msra.mxu0 0.0
        %1257 = vmatprep.subr.mxu0 0.0
        %1258 = vmatpush2.msra.mxu0 0.0
        %1259 = vmatprep.subr.mxu0 0.0
        %1260 = vmatpush2.msra.mxu0 0.0
        %1261 = vmatprep.subr.mxu0 0.0
        %1262 = vmatpush2.msra.mxu0 0.0
        %1263 = vmatprep.subr.mxu0 0.0
        %1264 = vmatpush2.msra.mxu0 0.0
        %1265 = vmatprep.subr.mxu0 0.0
        %1266 = vmatpush2.msra.mxu0 0.0
        %1267 = vmatprep.subr.mxu0 0.0
        %1268 = vmatpush2.msra.mxu0 0.0
        %1269 = vmatprep.subr.mxu0 0.0
        %1270 = vmatpush2.msra.mxu0 0.0
        %1271 = vmatprep.subr.mxu0 0.0
        %1272 = vmatpush2.msra.mxu0 0.0
        %1273 = vmatprep.subr.mxu0 0.0
        %1274 = vmatpush2.msra.mxu0 0.0
        %1275 = vmatprep.subr.mxu0 0.0
        %1276 = vmatpush2.msra.mxu0 0.0
        %1277 = vmatprep.mubr.f32.mxu0 0.0
        %1278 = vmatmul.mubr.f32.gmra.mxu0 %v1022
        %v1279 = vpop.f32.mrf.mxu0
        %v1280 = vadd.f32 %v703, %v1279
        %v1281 = vpop.f32.mrf.mxu0
        %1282 = vmatprep.mubr.f32.mxu0 0.0
        %1283 = vmatmul.mubr.f32.gmra.mxu0 %v1025
        %v1284 = vpop.f32.mrf.mxu0
        %v1285 = vadd.f32 %v708, %v1284
        %v1286 = vpop.f32.mrf.mxu0
        %1287 = vmatprep.mubr.f32.mxu0 0.0
        %1288 = vmatmul.mubr.f32.gmra.mxu0 %v1028
        %v1289 = vpop.f32.mrf.mxu0
        %v1290 = vadd.f32 %v713, %v1289
        %v1291 = vpop.f32.mrf.mxu0
        %1292 = vmatprep.mubr.f32.mxu0 0.0
        %1293 = vmatmul.mubr.f32.gmra.mxu0 %v1031
        %v1294 = vpop.f32.mrf.mxu0
        %v1295 = vadd.f32 %v718, %v1294
        %v1296 = vpop.f32.mrf.mxu0
        %1297 = vmatprep.mubr.f32.mxu0 0.0
        %1298 = vmatmul.mubr.f32.gmra.mxu0 %v1034
        %v1299 = vpop.f32.mrf.mxu0
        %v1300 = vadd.f32 %v723, %v1299
        %v1301 = vpop.f32.mrf.mxu0
        %1302 = vmatprep.mubr.f32.mxu0 0.0
        %1303 = vmatmul.mubr.f32.gmra.mxu0 %v1037
        %v1304 = vpop.f32.mrf.mxu0
        %v1305 = vadd.f32 %v728, %v1304
        %v1306 = vpop.f32.mrf.mxu0
        %1307 = vmatprep.mubr.f32.mxu0 0.0
        %1308 = vmatmul.mubr.f32.gmra.mxu0 %v1040
        %v1309 = vpop.f32.mrf.mxu0
        %v1310 = vadd.f32 %v733, %v1309
        %v1311 = vpop.f32.mrf.mxu0
        %1312 = vmatprep.mubr.f32.mxu0 0.0
        %1313 = vmatmul.mubr.f32.gmra.mxu0 %v1043
        %v1314 = vpop.f32.mrf.mxu0
        %v1315 = vadd.f32 %v738, %v1314
        %v1316 = vpop.f32.mrf.mxu0
        %1317 = vmatprep.mubr.f32.mxu0 0.0
        %1318 = vmatmul.mubr.f32.gmra.mxu0 %v1046
        %v1319 = vpop.f32.mrf.mxu0
        %v1320 = vadd.f32 %v743, %v1319
        %v1321 = vpop.f32.mrf.mxu0
        %1322 = vmatprep.mubr.f32.mxu0 0.0
        %1323 = vmatmul.mubr.f32.gmra.mxu0 %v1049
        %v1324 = vpop.f32.mrf.mxu0
        %v1325 = vadd.f32 %v748, %v1324
        %v1326 = vpop.f32.mrf.mxu0
        %1327 = vmatprep.mubr.f32.mxu0 0.0
        %1328 = vmatmul.mubr.f32.gmra.mxu0 %v1052
        %v1329 = vpop.f32.mrf.mxu0
        %v1330 = vadd.f32 %v753, %v1329
        %v1331 = vpop.f32.mrf.mxu0
        %1332 = vmatprep.mubr.f32.mxu0 0.0
        %1333 = vmatmul.mubr.f32.gmra.mxu0 %v1055
        %v1334 = vpop.f32.mrf.mxu0
        %v1335 = vadd.f32 %v758, %v1334
        %v1336 = vpop.f32.mrf.mxu0
        %1337 = vmatprep.mubr.f32.mxu0 0.0
        %1338 = vmatmul.mubr.f32.gmra.mxu0 %v1058
        %v1339 = vpop.f32.mrf.mxu0
        %v1340 = vadd.f32 %v763, %v1339
        %v1341 = vpop.f32.mrf.mxu0
        %1342 = vmatprep.mubr.f32.mxu0 0.0
        %1343 = vmatmul.mubr.f32.gmra.mxu0 %v1061
        %v1344 = vpop.f32.mrf.mxu0
        %v1345 = vadd.f32 %v768, %v1344
        %v1346 = vpop.f32.mrf.mxu0
        %1347 = vmatprep.mubr.f32.mxu0 0.0
        %1348 = vmatmul.mubr.f32.gmra.mxu0 %v1064
        %v1349 = vpop.f32.mrf.mxu0
        %v1350 = vadd.f32 %v773, %v1349
        %v1351 = vpop.f32.mrf.mxu0
        %1352 = vmatprep.mubr.f32.mxu0 0.0
        %1353 = vmatmul.mubr.f32.gmra.mxu0 %v1067
        %v1354 = vpop.f32.mrf.mxu0
        %v1355 = vadd.f32 %v778, %v1354
        %v1356 = vpop.f32.mrf.mxu0
        %1357 = vmatprep.mubr.f32.mxu0 0.0
        %1358 = vmatmul.mubr.f32.gmra.mxu0 %v1070
        %v1359 = vpop.f32.mrf.mxu0
        %v1360 = vadd.f32 %v783, %v1359
        %v1361 = vpop.f32.mrf.mxu0
        %1362 = vmatprep.mubr.f32.mxu0 0.0
        %1363 = vmatmul.mubr.f32.gmra.mxu0 %v1073
        %v1364 = vpop.f32.mrf.mxu0
        %v1365 = vadd.f32 %v788, %v1364
        %v1366 = vpop.f32.mrf.mxu0
        %1367 = vmatprep.mubr.f32.mxu0 0.0
        %1368 = vmatmul.mubr.f32.gmra.mxu0 %v1076
        %v1369 = vpop.f32.mrf.mxu0
        %v1370 = vadd.f32 %v793, %v1369
        %v1371 = vpop.f32.mrf.mxu0
        %1372 = vmatprep.mubr.f32.mxu0 0.0
        %1373 = vmatmul.mubr.f32.gmra.mxu0 %v1079
        %v1374 = vpop.f32.mrf.mxu0
        %v1375 = vadd.f32 %v798, %v1374
        %v1376 = vpop.f32.mrf.mxu0
        %1377 = vmatprep.mubr.f32.mxu0 0.0
        %1378 = vmatmul.mubr.f32.gmra.mxu0 %v1082
        %v1379 = vpop.f32.mrf.mxu0
        %v1380 = vadd.f32 %v803, %v1379
        %v1381 = vpop.f32.mrf.mxu0
        %1382 = vmatprep.mubr.f32.mxu0 0.0
        %1383 = vmatmul.mubr.f32.gmra.mxu0 %v1085
        %v1384 = vpop.f32.mrf.mxu0
        %v1385 = vadd.f32 %v808, %v1384
        %v1386 = vpop.f32.mrf.mxu0
        %1387 = vmatprep.mubr.f32.mxu0 0.0
        %1388 = vmatmul.mubr.f32.gmra.mxu0 %v1088
        %v1389 = vpop.f32.mrf.mxu0
        %v1390 = vadd.f32 %v813, %v1389
        %v1391 = vpop.f32.mrf.mxu0
        %1392 = vmatprep.mubr.f32.mxu0 0.0
        %1393 = vmatmul.mubr.f32.gmra.mxu0 %v1091
        %v1394 = vpop.f32.mrf.mxu0
        %v1395 = vadd.f32 %v818, %v1394
        %v1396 = vpop.f32.mrf.mxu0
        %1397 = vmatprep.mubr.f32.mxu0 0.0
        %1398 = vmatmul.mubr.f32.gmra.mxu0 %v1094
        %v1399 = vpop.f32.mrf.mxu0
        %v1400 = vadd.f32 %v823, %v1399
        %v1401 = vpop.f32.mrf.mxu0
        %1402 = vmatprep.mubr.f32.mxu0 0.0
        %1403 = vmatmul.mubr.f32.gmra.mxu0 %v1097
        %v1404 = vpop.f32.mrf.mxu0
        %v1405 = vadd.f32 %v828, %v1404
        %v1406 = vpop.f32.mrf.mxu0
        %1407 = vmatprep.mubr.f32.mxu0 0.0
        %1408 = vmatmul.mubr.f32.gmra.mxu0 %v1100
        %v1409 = vpop.f32.mrf.mxu0
        %v1410 = vadd.f32 %v833, %v1409
        %v1411 = vpop.f32.mrf.mxu0
        %1412 = vmatprep.mubr.f32.mxu0 0.0
        %1413 = vmatmul.mubr.f32.gmra.mxu0 %v1103
        %v1414 = vpop.f32.mrf.mxu0
        %v1415 = vadd.f32 %v838, %v1414
        %v1416 = vpop.f32.mrf.mxu0
        %1417 = vmatprep.mubr.f32.mxu0 0.0
        %1418 = vmatmul.mubr.f32.gmra.mxu0 %v1106
        %v1419 = vpop.f32.mrf.mxu0
        %v1420 = vadd.f32 %v843, %v1419
        %v1421 = vpop.f32.mrf.mxu0
        %1422 = vmatprep.mubr.f32.mxu0 0.0
        %1423 = vmatmul.mubr.f32.gmra.mxu0 %v1109
        %v1424 = vpop.f32.mrf.mxu0
        %v1425 = vadd.f32 %v848, %v1424
        %v1426 = vpop.f32.mrf.mxu0
        %1427 = vmatprep.mubr.f32.mxu0 0.0
        %1428 = vmatmul.mubr.f32.gmra.mxu0 %v1112
        %v1429 = vpop.f32.mrf.mxu0
        %v1430 = vadd.f32 %v853, %v1429
        %v1431 = vpop.f32.mrf.mxu0
        %1432 = vmatprep.mubr.f32.mxu0 0.0
        %1433 = vmatmul.mubr.f32.gmra.mxu0 %v1115
        %v1434 = vpop.f32.mrf.mxu0
        %v1435 = vadd.f32 %v858, %v1434
        %v1436 = vpop.f32.mrf.mxu0
        %1437 = vmatprep.mubr.f32.mxu0 0.0
        %1438 = vmatmul.mubr.f32.gmra.mxu0 %v1118
        %v1439 = vpop.f32.mrf.mxu0
        %v1440 = vadd.f32 %v863, %v1439
        %v1441 = vpop.f32.mrf.mxu0
        %1442 = vmatprep.mubr.f32.mxu0 0.0
        %1443 = vmatmul.mubr.f32.gmra.mxu0 %v1121
        %v1444 = vpop.f32.mrf.mxu0
        %v1445 = vadd.f32 %v868, %v1444
        %v1446 = vpop.f32.mrf.mxu0
        %1447 = vmatprep.mubr.f32.mxu0 0.0
        %1448 = vmatmul.mubr.f32.gmra.mxu0 %v1124
        %v1449 = vpop.f32.mrf.mxu0
        %v1450 = vadd.f32 %v873, %v1449
        %v1451 = vpop.f32.mrf.mxu0
        %1452 = vmatprep.mubr.f32.mxu0 0.0
        %1453 = vmatmul.mubr.f32.gmra.mxu0 %v1127
        %v1454 = vpop.f32.mrf.mxu0
        %v1455 = vadd.f32 %v878, %v1454
        %v1456 = vpop.f32.mrf.mxu0
        %1457 = vmatprep.mubr.f32.mxu0 0.0
        %1458 = vmatmul.mubr.f32.gmra.mxu0 %v1130
        %v1459 = vpop.f32.mrf.mxu0
        %v1460 = vadd.f32 %v883, %v1459
        %v1461 = vpop.f32.mrf.mxu0
        %1462 = vmatprep.mubr.f32.mxu0 0.0
        %1463 = vmatmul.mubr.f32.gmra.mxu0 %v1133
        %v1464 = vpop.f32.mrf.mxu0
        %v1465 = vadd.f32 %v888, %v1464
        %v1466 = vpop.f32.mrf.mxu0
        %1467 = vmatprep.mubr.f32.mxu0 0.0
        %1468 = vmatmul.mubr.f32.gmra.mxu0 %v1136
        %v1469 = vpop.f32.mrf.mxu0
        %v1470 = vadd.f32 %v893, %v1469
        %v1471 = vpop.f32.mrf.mxu0
        %1472 = vmatprep.mubr.f32.mxu0 0.0
        %1473 = vmatmul.mubr.f32.gmra.mxu0 %v1139
        %v1474 = vpop.f32.mrf.mxu0
        %v1475 = vadd.f32 %v898, %v1474
        %v1476 = vpop.f32.mrf.mxu0
        %1477 = vmatprep.mubr.f32.mxu0 0.0
        %1478 = vmatmul.mubr.f32.gmra.mxu0 %v1142
        %v1479 = vpop.f32.mrf.mxu0
        %v1480 = vadd.f32 %v903, %v1479
        %v1481 = vpop.f32.mrf.mxu0
        %1482 = vmatprep.mubr.f32.mxu0 0.0
        %1483 = vmatmul.mubr.f32.gmra.mxu0 %v1145
        %v1484 = vpop.f32.mrf.mxu0
        %v1485 = vadd.f32 %v908, %v1484
        %v1486 = vpop.f32.mrf.mxu0
        %1487 = vmatprep.mubr.f32.mxu0 0.0
        %1488 = vmatmul.mubr.f32.gmra.mxu0 %v1148
        %v1489 = vpop.f32.mrf.mxu0
        %v1490 = vadd.f32 %v913, %v1489
        %v1491 = vpop.f32.mrf.mxu0
        %1492 = vmatprep.mubr.f32.mxu0 0.0
        %1493 = vmatmul.mubr.f32.gmra.mxu0 %v1151
        %v1494 = vpop.f32.mrf.mxu0
        %v1495 = vadd.f32 %v918, %v1494
        %v1496 = vpop.f32.mrf.mxu0
        %1497 = vmatprep.mubr.f32.mxu0 0.0
        %1498 = vmatmul.mubr.f32.gmra.mxu0 %v1154
        %v1499 = vpop.f32.mrf.mxu0
        %v1500 = vadd.f32 %v923, %v1499
        %v1501 = vpop.f32.mrf.mxu0
        %1502 = vmatprep.mubr.f32.mxu0 0.0
        %1503 = vmatmul.mubr.f32.gmra.mxu0 %v1157
        %v1504 = vpop.f32.mrf.mxu0
        %v1505 = vadd.f32 %v928, %v1504
        %v1506 = vpop.f32.mrf.mxu0
        %1507 = vmatprep.mubr.f32.mxu0 0.0
        %1508 = vmatmul.mubr.f32.gmra.mxu0 %v1160
        %v1509 = vpop.f32.mrf.mxu0
        %v1510 = vadd.f32 %v933, %v1509
        %v1511 = vpop.f32.mrf.mxu0
        %1512 = vmatprep.mubr.f32.mxu0 0.0
        %1513 = vmatmul.mubr.f32.gmra.mxu0 %v1163
        %v1514 = vpop.f32.mrf.mxu0
        %v1515 = vadd.f32 %v938, %v1514
        %v1516 = vpop.f32.mrf.mxu0
        %1517 = vmatprep.mubr.f32.mxu0 0.0
        %1518 = vmatmul.mubr.f32.gmra.mxu0 %v1166
        %v1519 = vpop.f32.mrf.mxu0
        %v1520 = vadd.f32 %v943, %v1519
        %v1521 = vpop.f32.mrf.mxu0
        %1522 = vmatprep.mubr.f32.mxu0 0.0
        %1523 = vmatmul.mubr.f32.gmra.mxu0 %v1169
        %v1524 = vpop.f32.mrf.mxu0
        %v1525 = vadd.f32 %v948, %v1524
        %v1526 = vpop.f32.mrf.mxu0
        %1527 = vmatprep.mubr.f32.mxu0 0.0
        %1528 = vmatmul.mubr.f32.gmra.mxu0 %v1172
        %v1529 = vpop.f32.mrf.mxu0
        %v1530 = vadd.f32 %v953, %v1529
        %v1531 = vpop.f32.mrf.mxu0
        %1532 = vmatprep.mubr.f32.mxu0 0.0
        %1533 = vmatmul.mubr.f32.gmra.mxu0 %v1175
        %v1534 = vpop.f32.mrf.mxu0
        %v1535 = vadd.f32 %v958, %v1534
        %v1536 = vpop.f32.mrf.mxu0
        %1537 = vmatprep.mubr.f32.mxu0 0.0
        %1538 = vmatmul.mubr.f32.gmra.mxu0 %v1178
        %v1539 = vpop.f32.mrf.mxu0
        %v1540 = vadd.f32 %v963, %v1539
        %v1541 = vpop.f32.mrf.mxu0
        %1542 = vmatprep.mubr.f32.mxu0 0.0
        %1543 = vmatmul.mubr.f32.gmra.mxu0 %v1181
        %v1544 = vpop.f32.mrf.mxu0
        %v1545 = vadd.f32 %v968, %v1544
        %v1546 = vpop.f32.mrf.mxu0
        %1547 = vmatprep.mubr.f32.mxu0 0.0
        %1548 = vmatmul.mubr.f32.gmra.mxu0 %v1184
        %v1549 = vpop.f32.mrf.mxu0
        %v1550 = vadd.f32 %v973, %v1549
        %v1551 = vpop.f32.mrf.mxu0
        %1552 = vmatprep.mubr.f32.mxu0 0.0
        %1553 = vmatmul.mubr.f32.gmra.mxu0 %v1187
        %v1554 = vpop.f32.mrf.mxu0
        %v1555 = vadd.f32 %v978, %v1554
        %v1556 = vpop.f32.mrf.mxu0
        %1557 = vmatprep.mubr.f32.mxu0 0.0
        %1558 = vmatmul.mubr.f32.gmra.mxu0 %v1190
        %v1559 = vpop.f32.mrf.mxu0
        %v1560 = vadd.f32 %v983, %v1559
        %v1561 = vpop.f32.mrf.mxu0
        %1562 = vmatprep.mubr.f32.mxu0 0.0
        %1563 = vmatmul.mubr.f32.gmra.mxu0 %v1193
        %v1564 = vpop.f32.mrf.mxu0
        %v1565 = vadd.f32 %v988, %v1564
        %v1566 = vpop.f32.mrf.mxu0
        %1567 = vmatprep.mubr.f32.mxu0 0.0
        %1568 = vmatmul.mubr.f32.gmra.mxu0 %v1196
        %v1569 = vpop.f32.mrf.mxu0
        %v1570 = vadd.f32 %v993, %v1569
        %v1571 = vpop.f32.mrf.mxu0
        %1572 = vmatprep.mubr.f32.mxu0 0.0
        %1573 = vmatmul.mubr.f32.gmra.mxu0 %v1199
        %v1574 = vpop.f32.mrf.mxu0
        %v1575 = vadd.f32 %v998, %v1574
        %v1576 = vpop.f32.mrf.mxu0
        %1577 = vmatprep.mubr.f32.mxu0 0.0
        %1578 = vmatmul.mubr.f32.gmra.mxu0 %v1202
        %v1579 = vpop.f32.mrf.mxu0
        %v1580 = vadd.f32 %v1003, %v1579
        %v1581 = vpop.f32.mrf.mxu0
        %1582 = vmatprep.mubr.f32.mxu0 0.0
        %1583 = vmatmul.mubr.f32.gmra.mxu0 %v1205
        %v1584 = vpop.f32.mrf.mxu0
        %v1585 = vadd.f32 %v1008, %v1584
        %v1586 = vpop.f32.mrf.mxu0
        %1587 = vmatprep.mubr.f32.mxu0 0.0
        %1588 = vmatmul.mubr.f32.gmra.mxu0 %v1208
        %v1589 = vpop.f32.mrf.mxu0
        %v1590 = vadd.f32 %v1013, %v1589
        %v1591 = vpop.f32.mrf.mxu0
        %1592 = vmatprep.mubr.f32.mxu0 0.0
        %1593 = vmatmul.mubr.f32.gmra.mxu0 %v1211
        %v1594 = vpop.f32.mrf.mxu0
        %v1595 = vadd.f32 %v1018, %v1594
        %v1596 = vpop.f32.mrf.mxu0
        %1597 = vdwg.mxu0
        %v1598 = vmax.f32 %v1280, 0.0
        %v1599 = vmax.f32 %v1285, 0.0
        %v1600 = vmax.f32 %v1290, 0.0
        %v1601 = vmax.f32 %v1295, 0.0
        %v1602 = vmax.f32 %v1300, 0.0
        %v1603 = vmax.f32 %v1305, 0.0
        %v1604 = vmax.f32 %v1310, 0.0
        %v1605 = vmax.f32 %v1315, 0.0
        %v1606 = vmax.f32 %v1320, 0.0
        %v1607 = vmax.f32 %v1325, 0.0
        %v1608 = vmax.f32 %v1330, 0.0
        %v1609 = vmax.f32 %v1335, 0.0
        %v1610 = vmax.f32 %v1340, 0.0
        %v1611 = vmax.f32 %v1345, 0.0
        %v1612 = vmax.f32 %v1350, 0.0
        %v1613 = vmax.f32 %v1355, 0.0
        %v1614 = vmax.f32 %v1360, 0.0
        %v1615 = vmax.f32 %v1365, 0.0
        %v1616 = vmax.f32 %v1370, 0.0
        %v1617 = vmax.f32 %v1375, 0.0
        %v1618 = vmax.f32 %v1380, 0.0
        %v1619 = vmax.f32 %v1385, 0.0
        %v1620 = vmax.f32 %v1390, 0.0
        %v1621 = vmax.f32 %v1395, 0.0
        %v1622 = vmax.f32 %v1400, 0.0
        %v1623 = vmax.f32 %v1405, 0.0
        %v1624 = vmax.f32 %v1410, 0.0
        %v1625 = vmax.f32 %v1415, 0.0
        %v1626 = vmax.f32 %v1420, 0.0
        %v1627 = vmax.f32 %v1425, 0.0
        %v1628 = vmax.f32 %v1430, 0.0
        %v1629 = vmax.f32 %v1435, 0.0
        %v1630 = vmax.f32 %v1440, 0.0
        %v1631 = vmax.f32 %v1445, 0.0
        %v1632 = vmax.f32 %v1450, 0.0
        %v1633 = vmax.f32 %v1455, 0.0
        %v1634 = vmax.f32 %v1460, 0.0
        %v1635 = vmax.f32 %v1465, 0.0
        %v1636 = vmax.f32 %v1470, 0.0
        %v1637 = vmax.f32 %v1475, 0.0
        %v1638 = vmax.f32 %v1480, 0.0
        %v1639 = vmax.f32 %v1485, 0.0
        %v1640 = vmax.f32 %v1490, 0.0
        %v1641 = vmax.f32 %v1495, 0.0
        %v1642 = vmax.f32 %v1500, 0.0
        %v1643 = vmax.f32 %v1505, 0.0
        %v1644 = vmax.f32 %v1510, 0.0
        %v1645 = vmax.f32 %v1515, 0.0
        %v1646 = vmax.f32 %v1520, 0.0
        %v1647 = vmax.f32 %v1525, 0.0
        %v1648 = vmax.f32 %v1530, 0.0
        %v1649 = vmax.f32 %v1535, 0.0
        %v1650 = vmax.f32 %v1540, 0.0
        %v1651 = vmax.f32 %v1545, 0.0
        %v1652 = vmax.f32 %v1550, 0.0
        %v1653 = vmax.f32 %v1555, 0.0
        %v1654 = vmax.f32 %v1560, 0.0
        %v1655 = vmax.f32 %v1565, 0.0
        %v1656 = vmax.f32 %v1570, 0.0
        %v1657 = vmax.f32 %v1575, 0.0
        %v1658 = vmax.f32 %v1580, 0.0
        %v1659 = vmax.f32 %v1585, 0.0
        %v1660 = vmax.f32 %v1590, 0.0
        %v1661 = vmax.f32 %v1595, 0.0
        %v1662 = vadd.f32 %v1598, %v1599
        %v1663 = vrot.slane %v1662, 4
        %v1664 = vadd.f32 %v1662, %v1663
        %v1665 = vrot.slane %v1664, 2
        %v1666 = vadd.f32 %v1664, %v1665
        %v1667 = vrot.slane %v1666, 1
        %v1668 = vadd.f32 %v1666, %v1667
        %v1669 = vadd.f32 %v1600, %v1601
        %v1670 = vrot.slane %v1669, 4
        %v1671 = vadd.f32 %v1669, %v1670
        %v1672 = vrot.slane %v1671, 2
        %v1673 = vadd.f32 %v1671, %v1672
        %v1674 = vrot.slane %v1673, 1
        %v1675 = vadd.f32 %v1673, %v1674
        %v1676 = vadd.f32 %v1602, %v1603
        %v1677 = vrot.slane %v1676, 4
        %v1678 = vadd.f32 %v1676, %v1677
        %v1679 = vrot.slane %v1678, 2
        %v1680 = vadd.f32 %v1678, %v1679
        %v1681 = vrot.slane %v1680, 1
        %v1682 = vadd.f32 %v1680, %v1681
        %v1683 = vadd.f32 %v1604, %v1605
        %v1684 = vrot.slane %v1683, 4
        %v1685 = vadd.f32 %v1683, %v1684
        %v1686 = vrot.slane %v1685, 2
        %v1687 = vadd.f32 %v1685, %v1686
        %v1688 = vrot.slane %v1687, 1
        %v1689 = vadd.f32 %v1687, %v1688
        %v1690 = vadd.f32 %v1606, %v1607
        %v1691 = vrot.slane %v1690, 4
        %v1692 = vadd.f32 %v1690, %v1691
        %v1693 = vrot.slane %v1692, 2
        %v1694 = vadd.f32 %v1692, %v1693
        %v1695 = vrot.slane %v1694, 1
        %v1696 = vadd.f32 %v1694, %v1695
        %v1697 = vadd.f32 %v1608, %v1609
        %v1698 = vrot.slane %v1697, 4
        %v1699 = vadd.f32 %v1697, %v1698
        %v1700 = vrot.slane %v1699, 2
        %v1701 = vadd.f32 %v1699, %v1700
        %v1702 = vrot.slane %v1701, 1
        %v1703 = vadd.f32 %v1701, %v1702
        %v1704 = vadd.f32 %v1610, %v1611
        %v1705 = vrot.slane %v1704, 4
        %v1706 = vadd.f32 %v1704, %v1705
        %v1707 = vrot.slane %v1706, 2
        %v1708 = vadd.f32 %v1706, %v1707
        %v1709 = vrot.slane %v1708, 1
        %v1710 = vadd.f32 %v1708, %v1709
        %v1711 = vadd.f32 %v1612, %v1613
        %v1712 = vrot.slane %v1711, 4
        %v1713 = vadd.f32 %v1711, %v1712
        %v1714 = vrot.slane %v1713, 2
        %v1715 = vadd.f32 %v1713, %v1714
        %v1716 = vrot.slane %v1715, 1
        %v1717 = vadd.f32 %v1715, %v1716
        %v1718 = vadd.f32 %v1614, %v1615
        %v1719 = vrot.slane %v1718, 4
        %v1720 = vadd.f32 %v1718, %v1719
        %v1721 = vrot.slane %v1720, 2
        %v1722 = vadd.f32 %v1720, %v1721
        %v1723 = vrot.slane %v1722, 1
        %v1724 = vadd.f32 %v1722, %v1723
        %v1725 = vadd.f32 %v1616, %v1617
        %v1726 = vrot.slane %v1725, 4
        %v1727 = vadd.f32 %v1725, %v1726
        %v1728 = vrot.slane %v1727, 2
        %v1729 = vadd.f32 %v1727, %v1728
        %v1730 = vrot.slane %v1729, 1
        %v1731 = vadd.f32 %v1729, %v1730
        %v1732 = vadd.f32 %v1618, %v1619
        %v1733 = vrot.slane %v1732, 4
        %v1734 = vadd.f32 %v1732, %v1733
        %v1735 = vrot.slane %v1734, 2
        %v1736 = vadd.f32 %v1734, %v1735
        %v1737 = vrot.slane %v1736, 1
        %v1738 = vadd.f32 %v1736, %v1737
        %v1739 = vadd.f32 %v1620, %v1621
        %v1740 = vrot.slane %v1739, 4
        %v1741 = vadd.f32 %v1739, %v1740
        %v1742 = vrot.slane %v1741, 2
        %v1743 = vadd.f32 %v1741, %v1742
        %v1744 = vrot.slane %v1743, 1
        %v1745 = vadd.f32 %v1743, %v1744
        %v1746 = vadd.f32 %v1622, %v1623
        %v1747 = vrot.slane %v1746, 4
        %v1748 = vadd.f32 %v1746, %v1747
        %v1749 = vrot.slane %v1748, 2
        %v1750 = vadd.f32 %v1748, %v1749
        %v1751 = vrot.slane %v1750, 1
        %v1752 = vadd.f32 %v1750, %v1751
        %v1753 = vadd.f32 %v1624, %v1625
        %v1754 = vrot.slane %v1753, 4
        %v1755 = vadd.f32 %v1753, %v1754
        %v1756 = vrot.slane %v1755, 2
        %v1757 = vadd.f32 %v1755, %v1756
        %v1758 = vrot.slane %v1757, 1
        %v1759 = vadd.f32 %v1757, %v1758
        %v1760 = vadd.f32 %v1626, %v1627
        %v1761 = vrot.slane %v1760, 4
        %v1762 = vadd.f32 %v1760, %v1761
        %v1763 = vrot.slane %v1762, 2
        %v1764 = vadd.f32 %v1762, %v1763
        %v1765 = vrot.slane %v1764, 1
        %v1766 = vadd.f32 %v1764, %v1765
        %v1767 = vadd.f32 %v1628, %v1629
        %v1768 = vrot.slane %v1767, 4
        %v1769 = vadd.f32 %v1767, %v1768
        %v1770 = vrot.slane %v1769, 2
        %v1771 = vadd.f32 %v1769, %v1770
        %v1772 = vrot.slane %v1771, 1
        %v1773 = vadd.f32 %v1771, %v1772
        %v1774 = vadd.f32 %v1630, %v1631
        %v1775 = vrot.slane %v1774, 4
        %v1776 = vadd.f32 %v1774, %v1775
        %v1777 = vrot.slane %v1776, 2
        %v1778 = vadd.f32 %v1776, %v1777
        %v1779 = vrot.slane %v1778, 1
        %v1780 = vadd.f32 %v1778, %v1779
        %v1781 = vadd.f32 %v1632, %v1633
        %v1782 = vrot.slane %v1781, 4
        %v1783 = vadd.f32 %v1781, %v1782
        %v1784 = vrot.slane %v1783, 2
        %v1785 = vadd.f32 %v1783, %v1784
        %v1786 = vrot.slane %v1785, 1
        %v1787 = vadd.f32 %v1785, %v1786
        %v1788 = vadd.f32 %v1634, %v1635
        %v1789 = vrot.slane %v1788, 4
        %v1790 = vadd.f32 %v1788, %v1789
        %v1791 = vrot.slane %v1790, 2
        %v1792 = vadd.f32 %v1790, %v1791
        %v1793 = vrot.slane %v1792, 1
        %v1794 = vadd.f32 %v1792, %v1793
        %v1795 = vadd.f32 %v1636, %v1637
        %v1796 = vrot.slane %v1795, 4
        %v1797 = vadd.f32 %v1795, %v1796
        %v1798 = vrot.slane %v1797, 2
        %v1799 = vadd.f32 %v1797, %v1798
        %v1800 = vrot.slane %v1799, 1
        %v1801 = vadd.f32 %v1799, %v1800
        %v1802 = vadd.f32 %v1638, %v1639
        %v1803 = vrot.slane %v1802, 4
        %v1804 = vadd.f32 %v1802, %v1803
        %v1805 = vrot.slane %v1804, 2
        %v1806 = vadd.f32 %v1804, %v1805
        %v1807 = vrot.slane %v1806, 1
        %v1808 = vadd.f32 %v1806, %v1807
        %v1809 = vadd.f32 %v1640, %v1641
        %v1810 = vrot.slane %v1809, 4
        %v1811 = vadd.f32 %v1809, %v1810
        %v1812 = vrot.slane %v1811, 2
        %v1813 = vadd.f32 %v1811, %v1812
        %v1814 = vrot.slane %v1813, 1
        %v1815 = vadd.f32 %v1813, %v1814
        %v1816 = vadd.f32 %v1642, %v1643
        %v1817 = vrot.slane %v1816, 4
        %v1818 = vadd.f32 %v1816, %v1817
        %v1819 = vrot.slane %v1818, 2
        %v1820 = vadd.f32 %v1818, %v1819
        %v1821 = vrot.slane %v1820, 1
        %v1822 = vadd.f32 %v1820, %v1821
        %v1823 = vadd.f32 %v1644, %v1645
        %v1824 = vrot.slane %v1823, 4
        %v1825 = vadd.f32 %v1823, %v1824
        %v1826 = vrot.slane %v1825, 2
        %v1827 = vadd.f32 %v1825, %v1826
        %v1828 = vrot.slane %v1827, 1
        %v1829 = vadd.f32 %v1827, %v1828
        %v1830 = vadd.f32 %v1646, %v1647
        %v1831 = vrot.slane %v1830, 4
        %v1832 = vadd.f32 %v1830, %v1831
        %v1833 = vrot.slane %v1832, 2
        %v1834 = vadd.f32 %v1832, %v1833
        %v1835 = vrot.slane %v1834, 1
        %v1836 = vadd.f32 %v1834, %v1835
        %v1837 = vadd.f32 %v1648, %v1649
        %v1838 = vrot.slane %v1837, 4
        %v1839 = vadd.f32 %v1837, %v1838
        %v1840 = vrot.slane %v1839, 2
        %v1841 = vadd.f32 %v1839, %v1840
        %v1842 = vrot.slane %v1841, 1
        %v1843 = vadd.f32 %v1841, %v1842
        %v1844 = vadd.f32 %v1650, %v1651
        %v1845 = vrot.slane %v1844, 4
        %v1846 = vadd.f32 %v1844, %v1845
        %v1847 = vrot.slane %v1846, 2
        %v1848 = vadd.f32 %v1846, %v1847
        %v1849 = vrot.slane %v1848, 1
        %v1850 = vadd.f32 %v1848, %v1849
        %v1851 = vadd.f32 %v1652, %v1653
        %v1852 = vrot.slane %v1851, 4
        %v1853 = vadd.f32 %v1851, %v1852
        %v1854 = vrot.slane %v1853, 2
        %v1855 = vadd.f32 %v1853, %v1854
        %v1856 = vrot.slane %v1855, 1
        %v1857 = vadd.f32 %v1855, %v1856
        %v1858 = vadd.f32 %v1654, %v1655
        %v1859 = vrot.slane %v1858, 4
        %v1860 = vadd.f32 %v1858, %v1859
        %v1861 = vrot.slane %v1860, 2
        %v1862 = vadd.f32 %v1860, %v1861
        %v1863 = vrot.slane %v1862, 1
        %v1864 = vadd.f32 %v1862, %v1863
        %v1865 = vadd.f32 %v1656, %v1657
        %v1866 = vrot.slane %v1865, 4
        %v1867 = vadd.f32 %v1865, %v1866
        %v1868 = vrot.slane %v1867, 2
        %v1869 = vadd.f32 %v1867, %v1868
        %v1870 = vrot.slane %v1869, 1
        %v1871 = vadd.f32 %v1869, %v1870
        %v1872 = vadd.f32 %v1658, %v1659
        %v1873 = vrot.slane %v1872, 4
        %v1874 = vadd.f32 %v1872, %v1873
        %v1875 = vrot.slane %v1874, 2
        %v1876 = vadd.f32 %v1874, %v1875
        %v1877 = vrot.slane %v1876, 1
        %v1878 = vadd.f32 %v1876, %v1877
        %v1879 = vadd.f32 %v1660, %v1661
        %v1880 = vrot.slane %v1879, 4
        %v1881 = vadd.f32 %v1879, %v1880
        %v1882 = vrot.slane %v1881, 2
        %v1883 = vadd.f32 %v1881, %v1882
        %v1884 = vrot.slane %v1883, 1
        %v1885 = vadd.f32 %v1883, %v1884
        %v1886 = vld [vmem:[#allocation2] sm:$0xff]
        %v1887 = vld [vmem:[#allocation2 + $0x8] sm:$0xff]
        %v1888 = vld [vmem:[#allocation2 + $0x10] sm:$0xff]
        %v1889 = vld [vmem:[#allocation2 + $0x18] sm:$0xff]
        %vm1922 = vcmask 1041409
        %v1923 = vsel %vm1922, %v1675, %v1668
        %vm1924 = vcmask 1042434
        %v1925 = vsel %vm1924, %v1682, %v1923
        %vm1926 = vcmask 1043459
        %v1927 = vsel %vm1926, %v1689, %v1925
        %vm1928 = vcmask 1044484
        %v1929 = vsel %vm1928, %v1696, %v1927
        %vm1930 = vcmask 1045509
        %v1931 = vsel %vm1930, %v1703, %v1929
        %vm1932 = vcmask 1046534
        %v1933 = vsel %vm1932, %v1710, %v1931
        %vm1934 = vcmask 1047559
        %v1935 = vsel %vm1934, %v1717, %v1933
        %v1936 = vsel %vm1922, %v1731, %v1724
        %v1937 = vsel %vm1924, %v1738, %v1936
        %v1938 = vsel %vm1926, %v1745, %v1937
        %v1939 = vsel %vm1928, %v1752, %v1938
        %v1940 = vsel %vm1930, %v1759, %v1939
        %v1941 = vsel %vm1932, %v1766, %v1940
        %v1942 = vsel %vm1934, %v1773, %v1941
        %v1943 = vsel %vm1922, %v1787, %v1780
        %v1944 = vsel %vm1924, %v1794, %v1943
        %v1945 = vsel %vm1926, %v1801, %v1944
        %v1946 = vsel %vm1928, %v1808, %v1945
        %v1947 = vsel %vm1930, %v1815, %v1946
        %v1948 = vsel %vm1932, %v1822, %v1947
        %v1949 = vsel %vm1934, %v1829, %v1948
        %v1950 = vsel %vm1922, %v1843, %v1836
        %v1951 = vsel %vm1924, %v1850, %v1950
        %v1952 = vsel %vm1926, %v1857, %v1951
        %v1953 = vsel %vm1928, %v1864, %v1952
        %v1954 = vsel %vm1930, %v1871, %v1953
        %v1955 = vsel %vm1932, %v1878, %v1954
        %v1956 = vsel %vm1934, %v1885, %v1955
        %v1961 = vadd.f32 %v1886, %v1935
        %v1962 = vadd.f32 %v1887, %v1942
        %v1963 = vadd.f32 %v1888, %v1949
        %v1964 = vadd.f32 %v1889, %v1956
        %1965 = vst [vmem:[#allocation2] sm:$0xff] %v1961
        %1966 = vst [vmem:[#allocation2 + $0x8] sm:$0xff] %v1962
        %1967 = vst [vmem:[#allocation2 + $0x10] sm:$0xff] %v1963
        %1968 = vst [vmem:[#allocation2 + $0x18] sm:$0xff] %v1964
        %v1969 = vld [vmem:[%s4] sm:$0xff]
        %v1970 = vld [vmem:[%s4 + $0x8] sm:$0xff]
        %v1971 = vld [vmem:[%s4 + $0x10] sm:$0xff]
        %v1972 = vld [vmem:[%s4 + $0x18] sm:$0xff]
        %v1973 = vld [vmem:[%s4 + $0x20] sm:$0xff]
        %v1974 = vld [vmem:[%s4 + $0x28] sm:$0xff]
        %v1975 = vld [vmem:[%s4 + $0x30] sm:$0xff]
        %v1976 = vld [vmem:[%s4 + $0x38] sm:$0xff]
        %v1977 = vld [vmem:[%s4 + $0x40] sm:$0xff]
        %v1978 = vld [vmem:[%s4 + $0x48] sm:$0xff]
        %v1979 = vld [vmem:[%s4 + $0x50] sm:$0xff]
        %v1980 = vld [vmem:[%s4 + $0x58] sm:$0xff]
        %v1981 = vld [vmem:[%s4 + $0x60] sm:$0xff]
        %v1982 = vld [vmem:[%s4 + $0x68] sm:$0xff]
        %v1983 = vld [vmem:[%s4 + $0x70] sm:$0xff]
        %v1984 = vld [vmem:[%s4 + $0x78] sm:$0xff]
        %v1985 = vld [vmem:[#allocation2] sm:$0xff]
        %v1986 = vld [vmem:[#allocation2 + $0x8] sm:$0xff]
        %v1987 = vld [vmem:[#allocation2 + $0x10] sm:$0xff]
        %v1988 = vld [vmem:[#allocation2 + $0x18] sm:$0xff]
        %v1989 = vld [vmem:[%s5] sm:$0xff]
        %v1990 = vld [vmem:[%s5 + $0x8] sm:$0xff]
        %v1991 = vld [vmem:[%s5 + $0x10] sm:$0xff]
        %v1992 = vld [vmem:[%s5 + $0x18] sm:$0xff]
        %v1993 = vld [vmem:[%s5 + $0x20] sm:$0xff]
        %v1994 = vld [vmem:[%s5 + $0x28] sm:$0xff]
        %v1995 = vld [vmem:[%s5 + $0x30] sm:$0xff]
        %v1996 = vld [vmem:[%s5 + $0x38] sm:$0xff]
        %v1997 = vld [vmem:[%s5 + $0x40] sm:$0xff]
        %v1998 = vld [vmem:[%s5 + $0x48] sm:$0xff]
        %v1999 = vld [vmem:[%s5 + $0x50] sm:$0xff]
        %v2000 = vld [vmem:[%s5 + $0x58] sm:$0xff]
        %v2001 = vld [vmem:[%s5 + $0x60] sm:$0xff]
        %v2002 = vld [vmem:[%s5 + $0x68] sm:$0xff]
        %v2003 = vld [vmem:[%s5 + $0x70] sm:$0xff]
        %v2004 = vld [vmem:[%s5 + $0x78] sm:$0xff]
        %2006 = vset.pattern.permute.xlu0 0
        %2007 = vperm.xlu0 %2006, %v1989
        %v2008 = vpop.permute.xlu0 %2007
        %2011 = vset.pattern.permute.xlu0 0
        %2012 = vperm.xlu0 %2011, %v1990
        %v2013 = vpop.permute.xlu0 %2012
        %2016 = vset.pattern.permute.xlu0 0
        %2017 = vperm.xlu0 %2016, %v1991
        %v2018 = vpop.permute.xlu0 %2017
        %2021 = vset.pattern.permute.xlu0 0
        %2022 = vperm.xlu0 %2021, %v1992
        %v2023 = vpop.permute.xlu0 %2022
        %2026 = vset.pattern.permute.xlu0 0
        %2027 = vperm.xlu0 %2026, %v1993
        %v2028 = vpop.permute.xlu0 %2027
        %2031 = vset.pattern.permute.xlu0 0
        %2032 = vperm.xlu0 %2031, %v1994
        %v2033 = vpop.permute.xlu0 %2032
        %2036 = vset.pattern.permute.xlu0 0
        %2037 = vperm.xlu0 %2036, %v1995
        %v2038 = vpop.permute.xlu0 %2037
        %2041 = vset.pattern.permute.xlu0 0
        %2042 = vperm.xlu0 %2041, %v1996
        %v2043 = vpop.permute.xlu0 %2042
        %2046 = vset.pattern.permute.xlu0 0
        %2047 = vperm.xlu0 %2046, %v1997
        %v2048 = vpop.permute.xlu0 %2047
        %2051 = vset.pattern.permute.xlu0 0
        %2052 = vperm.xlu0 %2051, %v1998
        %v2053 = vpop.permute.xlu0 %2052
        %2056 = vset.pattern.permute.xlu0 0
        %2057 = vperm.xlu0 %2056, %v1999
        %v2058 = vpop.permute.xlu0 %2057
        %2061 = vset.pattern.permute.xlu0 0
        %2062 = vperm.xlu0 %2061, %v2000
        %v2063 = vpop.permute.xlu0 %2062
        %2066 = vset.pattern.permute.xlu0 0
        %2067 = vperm.xlu0 %2066, %v2001
        %v2068 = vpop.permute.xlu0 %2067
        %2071 = vset.pattern.permute.xlu0 0
        %2072 = vperm.xlu0 %2071, %v2002
        %v2073 = vpop.permute.xlu0 %2072
        %2076 = vset.pattern.permute.xlu0 0
        %2077 = vperm.xlu0 %2076, %v2003
        %v2078 = vpop.permute.xlu0 %2077
        %2081 = vset.pattern.permute.xlu0 0
        %2082 = vperm.xlu0 %2081, %v2004
        %v2083 = vpop.permute.xlu0 %2082
        %vm2085 = vcmask 261120
        %v2087 = vsel %vm2085, %v1969, 0
        %v2090 = vsel %vm2085, %v1970, 0
        %v2093 = vsel %vm2085, %v1971, 0
        %v2096 = vsel %vm2085, %v1972, 0
        %v2099 = vsel %vm2085, %v1973, 0
        %v2102 = vsel %vm2085, %v1974, 0
        %v2105 = vsel %vm2085, %v1975, 0
        %v2108 = vsel %vm2085, %v1976, 0
        %v2111 = vsel %vm2085, %v1977, 0
        %v2114 = vsel %vm2085, %v1978, 0
        %v2117 = vsel %vm2085, %v1979, 0
        %v2120 = vsel %vm2085, %v1980, 0
        %v2123 = vsel %vm2085, %v1981, 0
        %v2126 = vsel %vm2085, %v1982, 0
        %v2129 = vsel %vm2085, %v1983, 0
        %v2132 = vsel %vm2085, %v1984, 0
        %2134 = vmatprep.subr.mxu0 0.0
        %2135 = vmatpush1.msra.mxu0 0.0
        %2136 = vmatprep.subr.mxu0 0.0
        %2137 = vmatpush1.msra.mxu0 0.0
        %2138 = vmatprep.subr.mxu0 0.0
        %2139 = vmatpush1.msra.mxu0 0.0
        %2140 = vmatprep.subr.mxu0 0.0
        %2141 = vmatpush1.msra.mxu0 0.0
        %2142 = vmatprep.subr.mxu0 0.0
        %2143 = vmatpush1.msra.mxu0 0.0
        %2144 = vmatprep.subr.mxu0 0.0
        %2145 = vmatpush1.msra.mxu0 0.0
        %2146 = vmatprep.subr.mxu0 0.0
        %2147 = vmatpush1.msra.mxu0 0.0
        %2148 = vmatprep.subr.mxu0 0.0
        %2149 = vmatpush1.msra.mxu0 0.0
        %2150 = vmatprep.subr.mxu0 0.0
        %2151 = vmatpush1.msra.mxu0 0.0
        %2152 = vmatprep.subr.mxu0 0.0
        %2153 = vmatpush1.msra.mxu0 0.0
        %2154 = vmatprep.subr.mxu0 0.0
        %2155 = vmatpush1.msra.mxu0 0.0
        %2156 = vmatprep.subr.mxu0 0.0
        %2157 = vmatpush1.msra.mxu0 0.0
        %2158 = vmatprep.subr.mxu0 0.0
        %2159 = vmatpush1.msra.mxu0 %v1988
        %2160 = vmatprep.subr.mxu0 0.0
        %2161 = vmatpush1.msra.mxu0 %v1987
        %2162 = vmatprep.subr.mxu0 0.0
        %2163 = vmatpush1.msra.mxu0 %v1986
        %2164 = vmatprep.subr.mxu0 0.0
        %2165 = vmatpush1.msra.mxu0 %v1985
        %2166 = vmatprep.subr.mxu0 0.0
        %2167 = vmatpush2.msra.mxu0 0.0
        %2168 = vmatprep.subr.mxu0 0.0
        %2169 = vmatpush2.msra.mxu0 0.0
        %2170 = vmatprep.subr.mxu0 0.0
        %2171 = vmatpush2.msra.mxu0 0.0
        %2172 = vmatprep.subr.mxu0 0.0
        %2173 = vmatpush2.msra.mxu0 0.0
        %2174 = vmatprep.subr.mxu0 0.0
        %2175 = vmatpush2.msra.mxu0 0.0
        %2176 = vmatprep.subr.mxu0 0.0
        %2177 = vmatpush2.msra.mxu0 0.0
        %2178 = vmatprep.subr.mxu0 0.0
        %2179 = vmatpush2.msra.mxu0 0.0
        %2180 = vmatprep.subr.mxu0 0.0
        %2181 = vmatpush2.msra.mxu0 0.0
        %2182 = vmatprep.subr.mxu0 0.0
        %2183 = vmatpush2.msra.mxu0 0.0
        %2184 = vmatprep.subr.mxu0 0.0
        %2185 = vmatpush2.msra.mxu0 0.0
        %2186 = vmatprep.subr.mxu0 0.0
        %2187 = vmatpush2.msra.mxu0 0.0
        %2188 = vmatprep.subr.mxu0 0.0
        %2189 = vmatpush2.msra.mxu0 0.0
        %2190 = vmatprep.subr.mxu0 0.0
        %2191 = vmatpush2.msra.mxu0 0.0
        %2192 = vmatprep.subr.mxu0 0.0
        %2193 = vmatpush2.msra.mxu0 0.0
        %2194 = vmatprep.subr.mxu0 0.0
        %2195 = vmatpush2.msra.mxu0 0.0
        %2196 = vmatprep.subr.mxu0 0.0
        %2197 = vmatpush2.msra.mxu0 0.0
        %2198 = vmatprep.mubr.f32.mxu0 0.0
        %2199 = vmatmul.mubr.f32.gmra.mxu0 %v2087
        %v2200 = vpop.f32.mrf.mxu0
        %v2201 = vadd.f32 %v2008, %v2200
        %v2202 = vpop.f32.mrf.mxu0
        %2203 = vmatprep.mubr.f32.mxu0 0.0
        %2204 = vmatmul.mubr.f32.gmra.mxu0 %v2090
        %v2205 = vpop.f32.mrf.mxu0
        %v2206 = vadd.f32 %v2013, %v2205
        %v2207 = vpop.f32.mrf.mxu0
        %2208 = vmatprep.mubr.f32.mxu0 0.0
        %2209 = vmatmul.mubr.f32.gmra.mxu0 %v2093
        %v2210 = vpop.f32.mrf.mxu0
        %v2211 = vadd.f32 %v2018, %v2210
        %v2212 = vpop.f32.mrf.mxu0
        %2213 = vmatprep.mubr.f32.mxu0 0.0
        %2214 = vmatmul.mubr.f32.gmra.mxu0 %v2096
        %v2215 = vpop.f32.mrf.mxu0
        %v2216 = vadd.f32 %v2023, %v2215
        %v2217 = vpop.f32.mrf.mxu0
        %2218 = vmatprep.mubr.f32.mxu0 0.0
        %2219 = vmatmul.mubr.f32.gmra.mxu0 %v2099
        %v2220 = vpop.f32.mrf.mxu0
        %v2221 = vadd.f32 %v2028, %v2220
        %v2222 = vpop.f32.mrf.mxu0
        %2223 = vmatprep.mubr.f32.mxu0 0.0
        %2224 = vmatmul.mubr.f32.gmra.mxu0 %v2102
        %v2225 = vpop.f32.mrf.mxu0
        %v2226 = vadd.f32 %v2033, %v2225
        %v2227 = vpop.f32.mrf.mxu0
        %2228 = vmatprep.mubr.f32.mxu0 0.0
        %2229 = vmatmul.mubr.f32.gmra.mxu0 %v2105
        %v2230 = vpop.f32.mrf.mxu0
        %v2231 = vadd.f32 %v2038, %v2230
        %v2232 = vpop.f32.mrf.mxu0
        %2233 = vmatprep.mubr.f32.mxu0 0.0
        %2234 = vmatmul.mubr.f32.gmra.mxu0 %v2108
        %v2235 = vpop.f32.mrf.mxu0
        %v2236 = vadd.f32 %v2043, %v2235
        %v2237 = vpop.f32.mrf.mxu0
        %2238 = vmatprep.mubr.f32.mxu0 0.0
        %2239 = vmatmul.mubr.f32.gmra.mxu0 %v2111
        %v2240 = vpop.f32.mrf.mxu0
        %v2241 = vadd.f32 %v2048, %v2240
        %v2242 = vpop.f32.mrf.mxu0
        %2243 = vmatprep.mubr.f32.mxu0 0.0
        %2244 = vmatmul.mubr.f32.gmra.mxu0 %v2114
        %v2245 = vpop.f32.mrf.mxu0
        %v2246 = vadd.f32 %v2053, %v2245
        %v2247 = vpop.f32.mrf.mxu0
        %2248 = vmatprep.mubr.f32.mxu0 0.0
        %2249 = vmatmul.mubr.f32.gmra.mxu0 %v2117
        %v2250 = vpop.f32.mrf.mxu0
        %v2251 = vadd.f32 %v2058, %v2250
        %v2252 = vpop.f32.mrf.mxu0
        %2253 = vmatprep.mubr.f32.mxu0 0.0
        %2254 = vmatmul.mubr.f32.gmra.mxu0 %v2120
        %v2255 = vpop.f32.mrf.mxu0
        %v2256 = vadd.f32 %v2063, %v2255
        %v2257 = vpop.f32.mrf.mxu0
        %2258 = vmatprep.mubr.f32.mxu0 0.0
        %2259 = vmatmul.mubr.f32.gmra.mxu0 %v2123
        %v2260 = vpop.f32.mrf.mxu0
        %v2261 = vadd.f32 %v2068, %v2260
        %v2262 = vpop.f32.mrf.mxu0
        %2263 = vmatprep.mubr.f32.mxu0 0.0
        %2264 = vmatmul.mubr.f32.gmra.mxu0 %v2126
        %v2265 = vpop.f32.mrf.mxu0
        %v2266 = vadd.f32 %v2073, %v2265
        %v2267 = vpop.f32.mrf.mxu0
        %2268 = vmatprep.mubr.f32.mxu0 0.0
        %2269 = vmatmul.mubr.f32.gmra.mxu0 %v2129
        %v2270 = vpop.f32.mrf.mxu0
        %v2271 = vadd.f32 %v2078, %v2270
        %v2272 = vpop.f32.mrf.mxu0
        %2273 = vmatprep.mubr.f32.mxu0 0.0
        %2274 = vmatmul.mubr.f32.gmra.mxu0 %v2132
        %v2275 = vpop.f32.mrf.mxu0
        %v2276 = vadd.f32 %v2083, %v2275
        %v2277 = vpop.f32.mrf.mxu0
        %2278 = vdwg.mxu0
        %2279 = vst [vmem:[%s244] sm:$0xff] %v2201
        %2280 = vst [vmem:[%s244 + $0x8] sm:$0xff] %v2206
        %2281 = vst [vmem:[%s244 + $0x10] sm:$0xff] %v2211
        %2282 = vst [vmem:[%s244 + $0x18] sm:$0xff] %v2216
        %2283 = vst [vmem:[%s244 + $0x20] sm:$0xff] %v2221
        %2284 = vst [vmem:[%s244 + $0x28] sm:$0xff] %v2226
        %2285 = vst [vmem:[%s244 + $0x30] sm:$0xff] %v2231
        %2286 = vst [vmem:[%s244 + $0x38] sm:$0xff] %v2236
        %2287 = vst [vmem:[%s244 + $0x40] sm:$0xff] %v2241
        %2288 = vst [vmem:[%s244 + $0x48] sm:$0xff] %v2246
        %2289 = vst [vmem:[%s244 + $0x50] sm:$0xff] %v2251
        %2290 = vst [vmem:[%s244 + $0x58] sm:$0xff] %v2256
        %2291 = vst [vmem:[%s244 + $0x60] sm:$0xff] %v2261
        %2292 = vst [vmem:[%s244 + $0x68] sm:$0xff] %v2266
        %2293 = vst [vmem:[%s244 + $0x70] sm:$0xff] %v2271
        %2294 = vst [vmem:[%s244 + $0x78] sm:$0xff] %v2276
        %s2295 = sand.u32 %s159, 1
        %s2296 = scalar_lea.sflag [#allocation4], %s2295
        %s2297 = sand.u32 %s159, 1
        %s2298 = smul.addr %s2297, 128
        %s2299 = scalar_lea.vmem [#allocation3], %s2298
        // Predicated region
        $region45: #{tpu_custom_call.1} parent=43 // pred_check
          %p2300 = pneg %p169
        $region46: #{tpu_custom_call.1} parent=43 // pred_check_branch
          %2302 = sbr.rel (%p2300) target = $region48
        $region47: #{tpu_custom_call.1} parent=43 // pred_region
          %s2304 = ssub.s32 2048, 2048
          %2305 = vsyncadd %s2296, %s2304
          %s2306 = smul.addr %s20, 16
          %s2307 = smul.addr %s2306, 128
          %s2308 = scalar_lea.hbm %s6, %s2307
          %s2309 = sshll.u32 %s2299, 4
          %s2310 = int_to_ptr.vmem [resolvable:$true] %s2309
          %2315 = dma.vmem_to_hbm [thread:$0]  %s2310, 2048, %s2308, %s2296, 128, 128, 8
        $region48: #{tpu_custom_call.1} parent=43 // pred_fallthru
          _
      $region44: #{tpu_custom_call.1} parent=5 // pred_fallthru
        _
      %p2316 = scmp.le.s32.totalorder 2, %s15
      // Predicated region
      $region49: #{tpu_custom_call.1} parent=5 // pred_check
        %p2317 = pneg %p2316
      $region50: #{tpu_custom_call.1} parent=5 // pred_check_branch
        %2319 = sbr.rel (%p2317) target = $region52
      $region51: #{tpu_custom_call.1} parent=5 // pred_region
        %s2320 = ssub.s32 %s15, 2
        // Predicated region
        $region53: #{tpu_custom_call.1} parent=51 // pred_check
          %p2321 = pneg %p175
        $region54: #{tpu_custom_call.1} parent=51 // pred_check_branch
          %2323 = sbr.rel (%p2321) target = $region56
        $region55: #{tpu_custom_call.1} parent=51 // pred_region
          %s2324 = sand.u32 %s160, 1
          %s2325 = scalar_lea.sflag [#allocation4], %s2324
          %s2326 = sand.u32 %s160, 1
          %s2327 = smul.addr %s2326, 128
          %s2328 = scalar_lea.vmem [#allocation3], %s2327
          %2329 = dma.done %s2325, 2048
        $region56: #{tpu_custom_call.1} parent=51 // pred_fallthru
          _
      $region52: #{tpu_custom_call.1} parent=5 // pred_fallthru
        _
    $region6: #{tpu_custom_call.1} parent=1 // loop_footer
      %s19 = sadd.s32 1, %s15
    $region7: #{tpu_custom_call.1} parent=1 // loop_footer_branch
      %14 = sbr.rel target = $region3
    $region8: #{tpu_custom_call.1} parent=1 // loop_exit
      _
    %2330 = vsyncpa [#allocation4], 1
    %s2331 = scalar_lea.sflag [#allocation4], 1
    %2332 = vsyncpa %s2331, 1

</llo_original>
